<compile_context>
chip_gen: v6e
topology: v6e:2x2x1
jax: 0.10.0
libtpu: 0.0.40
codegen_flags: <defaults>
</compile_context>

<pallas_src>
import math
import functools

import jax
import jax.numpy as jnp
from jax import lax
from jax.experimental import pallas as pl
from jax.experimental.pallas import tpu as pltpu


# ----------------------------- kernel helpers -----------------------------

def _layernorm(x, gamma, beta, eps=1e-5):
    # PyTorch nn.LayerNorm semantics: biased variance over last dim, eps=1e-5.
    mean = jnp.mean(x, axis=-1, keepdims=True)
    var = jnp.mean((x - mean) ** 2, axis=-1, keepdims=True)
    return (x - mean) * lax.rsqrt(var + eps) * gamma + beta


# ----------------------- all transformer layers, fused ----------------------
# grid = (B, L).  The residual stream for batch element b lives in an f32 VMEM
# scratch across the whole layer axis; per-layer weights are blocks indexed by
# the layer grid axis (so their DMA pipelines across layers).  Per layer:
#   x = x + c_proj( causal_softmax_attention( c_attn( ln_1(x) ) ) )
#   x = x + mlp.c_proj( gelu_tanh( mlp.c_fc( ln_2(x) ) ) )

def layers_kernel(x_ref, g1_ref, b1_ref, wqkv_ref, bqkv_ref, wo_ref, bo_ref,
                  g2_ref, b2_ref, wfc_ref, bfc_ref, wmp_ref, bmp_ref,
                  o_ref, acc_ref, *, n_head):
    f32 = jnp.float32
    bf16 = jnp.bfloat16
    li = pl.program_id(1)

    @pl.when(li == 0)
    def _():  # new batch element: load the residual stream into the f32 carry
        acc_ref[...] = x_ref[0].astype(f32)

    x = acc_ref[...]                                  # (T, D) f32 residual stream
    T, D = x.shape
    dh = D // n_head
    scale = 1.0 / math.sqrt(dh)

    # ---- LN1 -> fused QKV projection: one lane-dense (T,D)x(D,3D) matmul ----
    h = _layernorm(x, g1_ref[0], b1_ref[0]).astype(bf16)
    qkv = jnp.dot(h, wqkv_ref[0], preferred_element_type=f32) + bqkv_ref[0]   # (T, 3D)

    # Head split: static lane slices stacked on a new leading head axis
    # (major-dim stack — no relayout of the tiled minor dims).
    def heads(off):
        return jnp.stack(
            [qkv[:, off + i * dh: off + (i + 1) * dh] for i in range(n_head)],
            axis=0).astype(bf16)                       # (H, T, dh) bf16

    q, k, v = heads(0), heads(D), heads(2 * D)

    # ---- causal softmax attention, batched over heads (batch dim leading) ----
    row = lax.broadcasted_iota(jnp.int32, (T, T), 0)
    col = lax.broadcasted_iota(jnp.int32, (T, T), 1)
    mask = jnp.where(col <= row, 0.0, -1e30).astype(f32)      # finite additive mask

    s = jnp.einsum('hqd,hkd->hqk', q, k, preferred_element_type=f32) * scale + mask[None]
    m = jnp.max(s, axis=-1, keepdims=True)                    # f32 (H,T,1)
    p = jnp.exp(s - m)                                        # unnormalized probs
    l_sum = jnp.sum(p, axis=-1, keepdims=True)                # f32 (H,T,1)
    att = jnp.einsum('hqk,hkd->hqd', p.astype(bf16), v,
                     preferred_element_type=f32)              # (H, T, dh) f32
    att = att * pl.reciprocal(l_sum)                          # normalize after P@V (exact)

    # ---- fused output projection: lane-concat heads -> one (T,D)x(D,D) dot ----
    att_td = jnp.concatenate([att[i] for i in range(n_head)], axis=-1).astype(bf16)
    x = x + jnp.dot(att_td, wo_ref[0], preferred_element_type=f32) + bo_ref[0]

    # ---- LN2 -> MLP (gelu tanh) ----
    h2 = _layernorm(x, g2_ref[0], b2_ref[0]).astype(bf16)
    ff = jnp.dot(h2, wfc_ref[0], preferred_element_type=f32) + bfc_ref[0]
    ff = jax.nn.gelu(ff, approximate=True)                    # matches nn.GELU('tanh')
    x = x + jnp.dot(ff.astype(bf16), wmp_ref[0], preferred_element_type=f32) + bmp_ref[0]

    acc_ref[...] = x                                          # carry to next layer (f32)

    @pl.when(li == pl.num_programs(1) - 1)
    def _():
        o_ref[0] = x.astype(o_ref.dtype)                      # bf16 at the stack boundary


# ------------------------------ final LN + head -----------------------------
# grid = (B, V_pad // v_tile).  ln_f is computed once per batch element (vocab
# tile 0) and cached in a VMEM scratch; every vocab tile is then a pure
# (T,D)x(v_tile,D) contraction over D (wte stays (V,D); no transpose in HBM).

def head_kernel(x_ref, gf_ref, bf_ref, wte_ref, o_ref, h_ref):
    @pl.when(pl.program_id(1) == 0)
    def _():
        xf = x_ref[0].astype(jnp.float32)
        h_ref[...] = _layernorm(xf, gf_ref[...], bf_ref[...]).astype(jnp.bfloat16)

    o_ref[0] = lax.dot_general(
        h_ref[...], wte_ref[...],                     # (T, D) x (v_tile, D)
        dimension_numbers=(((1,), (1,)), ((), ())),
        preferred_element_type=jnp.float32)           # (T, v_tile) f32, lane-dense store


# ------------------------------ pallas_call glue ----------------------------

def _vmem_limit(est_bytes):
    phys = 64 << 20
    try:  # generation-aware cap (128 MiB on v5e/v6e, 64 MiB on v7x)
        phys = int(getattr(pltpu.get_tpu_info(), "vmem_capacity_bytes", phys))
    except Exception:
        pass
    cap = (phys * 3) // 4                             # headroom for compiler scratch
    return int(min(cap, max(32 << 20, 2 * int(est_bytes))))


def _layer_temporaries_bytes(T, D, M, H):
    dh = D // H
    f32, b16 = 4, 2
    act = 2 * T * D * f32                             # residual + scratch carry
    lnh = T * D * b16
    qkv = T * 3 * D * (f32 + b16)                     # fused qkv + bf16 head copies
    score = H * T * T * (2 * f32 + b16)               # s, exp(s-m), bf16 probs
    attn = H * T * dh * f32 + T * D * (f32 + b16)
    mlp = T * M * (f32 + b16)
    return act + lnh + qkv + score + attn + mlp


def _stack_call(x, params, n_head):
    B, T, D = x.shape
    st = params["stack"]
    L = st["w_attn"].shape[0]
    M = st["w_fc"].shape[2]

    weight_names = ("g1", "b1", "w_attn", "b_attn", "w_o", "b_o",
                    "g2", "b2", "w_fc", "b_fc", "w_mp", "b_mp")
    weights = tuple(st[k] for k in weight_names)

    def wspec(a):  # one layer's slice per grid step along the layer axis
        n_trail = a.ndim - 1
        return pl.BlockSpec((1,) + a.shape[1:],
                            lambda b, li, _n=n_trail: (li,) + (0,) * _n)

    act_spec = pl.BlockSpec((1, T, D), lambda b, li: (b, 0, 0))

    w_bytes = sum(int(w.size) * w.dtype.itemsize for w in weights)
    io_bytes = 2 * 2 * T * D * x.dtype.itemsize       # double-buffered act in/out blocks
    est = _layer_temporaries_bytes(T, D, M, n_head) + 2 * w_bytes + io_bytes

    return pl.pallas_call(
        functools.partial(layers_kernel, n_head=n_head),
        grid=(B, L),
        in_specs=[act_spec] + [wspec(w) for w in weights],
        out_specs=act_spec,
        out_shape=jax.ShapeDtypeStruct((B, T, D), x.dtype),
        scratch_shapes=[pltpu.VMEM((T, D), jnp.float32)],      # residual carry
        compiler_params=pltpu.CompilerParams(
            dimension_semantics=("parallel", "arbitrary"),
            vmem_limit_bytes=_vmem_limit(est)),
    )(x, *weights)


def _head_call(x, gf, bf, wte):
    B, T, D = x.shape
    V = wte.shape[0]

    # Lane-dense vocab tiles: pad V to a multiple of the tile (128 for small
    # vocab, 512 for real vocab) instead of falling back to v_tile=V.
    v_tile = 512 if V > 512 else 128 * ((V + 127) // 128)
    V_pad = v_tile * ((V + v_tile - 1) // v_tile)
    wte_p = wte if V_pad == V else jnp.pad(wte, ((0, V_pad - V), (0, 0)))

    est = (2 * T * D * x.dtype.itemsize
           + 2 * v_tile * D * wte_p.dtype.itemsize
           + 2 * T * v_tile * 4
           + T * D * 2 + 2 * D * 4)

    logits = pl.pallas_call(
        head_kernel,
        grid=(B, V_pad // v_tile),
        in_specs=[pl.BlockSpec((1, T, D), lambda b, v: (b, 0, 0)),
                  pl.BlockSpec((1, D), lambda b, v: (0, 0)),
                  pl.BlockSpec((1, D), lambda b, v: (0, 0)),
                  pl.BlockSpec((v_tile, D), lambda b, v: (v, 0))],
        out_specs=pl.BlockSpec((1, T, v_tile), lambda b, v: (b, 0, v)),
        out_shape=jax.ShapeDtypeStruct((B, T, V_pad), jnp.float32),
        scratch_shapes=[pltpu.VMEM((T, D), jnp.bfloat16)],      # cached ln_f(x)
        compiler_params=pltpu.CompilerParams(
            dimension_semantics=("parallel", "arbitrary"),      # scratch reused across v
            vmem_limit_bytes=_vmem_limit(est)),
    )(x, gf, bf, wte_p)
    return logits[:, :, :V]


def transformer_forward(token_ids, params, cfg):
    """token_ids: (B, T) int32.  Returns logits (B, T, n_vocab) float32."""
    T = token_ids.shape[1]
    # Embedding gather kept in XLA glue (no useful Pallas win at this size).
    x = jnp.take(params["wte"], token_ids, axis=0) + params["wpe"][:T][None, :, :]
    x = x.astype(jnp.bfloat16)
    x = _stack_call(x, params, cfg["n_head"])
    return _head_call(x, params["gf"], params["bf"], params["wte"])


# ------------------------------ param init ---------------------------------

def init_params(key, cfg):
    D, M, V = cfg["n_state"], cfg["n_mlp"], cfg["n_vocab"]
    C, L = cfg["n_ctx"], cfg["n_layer"]
    wdt = jnp.bfloat16                                  # matmul weights stored bf16

    def linear(k, din, dout):
        kw, kb = jax.random.split(k)
        w = (0.02 * jax.random.normal(kw, (din, dout), jnp.float32)).astype(wdt)  # [in, out]
        b = 0.02 * jax.random.normal(kb, (1, dout), jnp.float32)
        return w, b

    keys = jax.random.split(key, 2 + L)
    params = {
        "wte": (0.02 * jax.random.normal(keys[0], (V, D), jnp.float32)).astype(wdt),
        "wpe": (0.02 * jax.random.normal(keys[1], (C, D), jnp.float32)).astype(wdt),
        "gf": jnp.ones((1, D), jnp.float32),
        "bf": jnp.zeros((1, D), jnp.float32),
    }

    per = {k: [] for k in ("g1", "b1", "w_attn", "b_attn", "w_o", "b_o",
                           "g2", "b2", "w_fc", "b_fc", "w_mp", "b_mp")}
    for li in range(L):
        k = jax.random.split(keys[2 + li], 4)
        w_attn, b_attn = linear(k[0], D, 3 * D)         # fused c_attn
        w_o, b_o = linear(k[1], D, D)                   # attention c_proj
        w_fc, b_fc = linear(k[2], D, M)
        w_mp, b_mp = linear(k[3], M, D)
        per["g1"].append(jnp.ones((1, D), jnp.float32))
        per["b1"].append(jnp.zeros((1, D), jnp.float32))
        per["g2"].append(jnp.ones((1, D), jnp.float32))
        per["b2"].append(jnp.zeros((1, D), jnp.float32))
        per["w_attn"].append(w_attn); per["b_attn"].append(b_attn)
        per["w_o"].append(w_o);       per["b_o"].append(b_o)
        per["w_fc"].append(w_fc);     per["b_fc"].append(b_fc)
        per["w_mp"].append(w_mp);     per["b_mp"].append(b_mp)

    # Stack per-layer params on a leading layer axis so a single pallas_call
    # iterates layers as a grid dimension (weight DMA pipelines across layers).
    params["stack"] = {k: jnp.stack(v, axis=0) for k, v in per.items()}
    return params


# ---------------------------------- main ------------------------------------

if __name__ == "__main__":
    cfg = dict(n_vocab=64, n_ctx=8, n_state=32, n_head=4, n_mlp=64, n_layer=2)
    B, T = 4, cfg["n_ctx"]                              # B=4: grid depth B*L = 8 steps

    key = jax.random.PRNGKey(0)
    k_param, k_tok = jax.random.split(key)
    params = init_params(k_param, cfg)
    token_ids = jax.random.randint(k_tok, (B, T), 0, cfg["n_vocab"], dtype=jnp.int32)

    fwd = jax.jit(lambda toks, p: transformer_forward(toks, p, cfg))
    logits = fwd(token_ids, params)
    jax.block_until_ready(logits)

    assert logits.shape == (B, T, cfg["n_vocab"]) and logits.dtype == jnp.float32
    assert bool(jnp.all(jnp.isfinite(logits)))
    print("KERNEL_OK")
</pallas_src>

<mosaic_0001>
module attributes {stable_mosaic.version = 11 : i64} {
  func.func @layers_kernel(%arg0: i32, %arg1: i32, %arg2: memref<1x8x32xbf16, #tpu.memory_space<vmem>>, %arg3: memref<1x1x32xf32, #tpu.memory_space<vmem>>, %arg4: memref<1x1x32xf32, #tpu.memory_space<vmem>>, %arg5: memref<1x32x96xbf16, #tpu.memory_space<vmem>>, %arg6: memref<1x1x96xf32, #tpu.memory_space<vmem>>, %arg7: memref<1x32x32xbf16, #tpu.memory_space<vmem>>, %arg8: memref<1x1x32xf32, #tpu.memory_space<vmem>>, %arg9: memref<1x1x32xf32, #tpu.memory_space<vmem>>, %arg10: memref<1x1x32xf32, #tpu.memory_space<vmem>>, %arg11: memref<1x32x64xbf16, #tpu.memory_space<vmem>>, %arg12: memref<1x1x64xf32, #tpu.memory_space<vmem>>, %arg13: memref<1x64x32xbf16, #tpu.memory_space<vmem>>, %arg14: memref<1x1x32xf32, #tpu.memory_space<vmem>>, %arg15: memref<1x8x32xbf16, #tpu.memory_space<vmem>>, %arg16: memref<8x32xf32, #tpu.memory_space<vmem>>) attributes {dimension_semantics = [#tpu.dimension_semantics<parallel>, #tpu.dimension_semantics<arbitrary>], iteration_bounds = array<i64: 4, 2>, scalar_prefetch = 0 : i64, scratch_operands = 1 : i64, tpu.core_type = #tpu.core_type<tc>, window_params = [{transform_indices = @transform_0, window_bounds = array<i64: 1, 8, 32>}, {transform_indices = @transform_1, window_bounds = array<i64: 1, 1, 32>}, {transform_indices = @transform_2, window_bounds = array<i64: 1, 1, 32>}, {transform_indices = @transform_3, window_bounds = array<i64: 1, 32, 96>}, {transform_indices = @transform_4, window_bounds = array<i64: 1, 1, 96>}, {transform_indices = @transform_5, window_bounds = array<i64: 1, 32, 32>}, {transform_indices = @transform_6, window_bounds = array<i64: 1, 1, 32>}, {transform_indices = @transform_7, window_bounds = array<i64: 1, 1, 32>}, {transform_indices = @transform_8, window_bounds = array<i64: 1, 1, 32>}, {transform_indices = @transform_9, window_bounds = array<i64: 1, 32, 64>}, {transform_indices = @transform_10, window_bounds = array<i64: 1, 1, 64>}, {transform_indices = @transform_11, window_bounds = array<i64: 1, 64, 32>}, {transform_indices = @transform_12, window_bounds = array<i64: 1, 1, 32>}, {transform_indices = @transform_13, window_bounds = array<i64: 1, 8, 32>}]} {
    %c0_i32 = arith.constant 0 : i32
    %0 = arith.cmpi eq, %arg1, %c0_i32 : i32
    %1 = arith.extui %0 : i1 to i32
    %c0_i32_0 = arith.constant 0 : i32
    %2 = arith.cmpi ne, %1, %c0_i32_0 : i32
    scf.if %2 {
      %c0_65 = arith.constant 0 : index
      %c0_66 = arith.constant 0 : index
      %c0_67 = arith.constant 0 : index
      %170 = vector.load %arg2[%c0_65, %c0_66, %c0_67] : memref<1x8x32xbf16, #tpu.memory_space<vmem>>, vector<1x8x32xbf16>
      %171 = vector.shape_cast %170 : vector<1x8x32xbf16> to vector<8x32xbf16>
      %172 = arith.extf %171 : vector<8x32xbf16> to vector<8x32xf32>
      %c0_68 = arith.constant 0 : index
      %c0_69 = arith.constant 0 : index
      %173 = vector.load %arg16[%c0_68, %c0_69] : memref<8x32xf32, #tpu.memory_space<vmem>>, vector<8x32xf32>
      tpu.vector_store %arg16[%c0_68, %c0_69], %172 {strides = array<i32>} : memref<8x32xf32, #tpu.memory_space<vmem>>, vector<8x32xf32>,
    } else {
    }
    %c0 = arith.constant 0 : index
    %c0_1 = arith.constant 0 : index
    %3 = vector.load %arg16[%c0, %c0_1] : memref<8x32xf32, #tpu.memory_space<vmem>>, vector<8x32xf32>
    %c0_2 = arith.constant 0 : index
    %c0_3 = arith.constant 0 : index
    %c0_4 = arith.constant 0 : index
    %4 = vector.load %arg3[%c0_2, %c0_3, %c0_4] : memref<1x1x32xf32, #tpu.memory_space<vmem>>, vector<1x1x32xf32>
    %5 = vector.shape_cast %4 : vector<1x1x32xf32> to vector<1x32xf32>
    %c0_5 = arith.constant 0 : index
    %c0_6 = arith.constant 0 : index
    %c0_7 = arith.constant 0 : index
    %6 = vector.load %arg4[%c0_5, %c0_6, %c0_7] : memref<1x1x32xf32, #tpu.memory_space<vmem>>, vector<1x1x32xf32>
    %7 = vector.shape_cast %6 : vector<1x1x32xf32> to vector<1x32xf32>
    %cst = arith.constant dense<0.000000e+00> : vector<8xf32>
    %8 = vector.multi_reduction <add>, %3, %cst [1] : vector<8x32xf32> to vector<8xf32>
    %9 = vector.shape_cast %8 : vector<8xf32> to vector<8x1xf32>
    %cst_8 = arith.constant 3.200000e+01 : f32
    %10 = vector.broadcast %cst_8 : f32 to vector<8x1xf32>
    %11 = arith.divf %9, %10 : vector<8x1xf32>
    %12 = vector.broadcast %11 : vector<8x1xf32> to vector<8x32xf32>
    %13 = arith.subf %3, %12 : vector<8x32xf32>
    %14 = arith.mulf %13, %13 : vector<8x32xf32>
    %cst_9 = arith.constant dense<0.000000e+00> : vector<8xf32>
    %15 = vector.multi_reduction <add>, %14, %cst_9 [1] : vector<8x32xf32> to vector<8xf32>
    %16 = vector.shape_cast %15 : vector<8xf32> to vector<8x1xf32>
    %cst_10 = arith.constant 3.200000e+01 : f32
    %17 = vector.broadcast %cst_10 : f32 to vector<8x1xf32>
    %18 = arith.divf %16, %17 : vector<8x1xf32>
    %19 = vector.broadcast %11 : vector<8x1xf32> to vector<8x32xf32>
    %20 = arith.subf %3, %19 : vector<8x32xf32>
    %cst_11 = arith.constant 9.99999974E-6 : f32
    %21 = vector.broadcast %cst_11 : f32 to vector<8x1xf32>
    %22 = arith.addf %18, %21 : vector<8x1xf32>
    %23 = math.rsqrt %22 : vector<8x1xf32>
    %24 = vector.broadcast %23 : vector<8x1xf32> to vector<8x32xf32>
    %25 = arith.mulf %20, %24 : vector<8x32xf32>
    %26 = vector.broadcast %5 : vector<1x32xf32> to vector<8x32xf32>
    %27 = arith.mulf %25, %26 : vector<8x32xf32>
    %28 = vector.broadcast %7 : vector<1x32xf32> to vector<8x32xf32>
    %29 = arith.addf %27, %28 : vector<8x32xf32>
    %30 = arith.truncf %29 : vector<8x32xf32> to vector<8x32xbf16>
    %c0_12 = arith.constant 0 : index
    %c0_13 = arith.constant 0 : index
    %c0_14 = arith.constant 0 : index
    %31 = vector.load %arg5[%c0_12, %c0_13, %c0_14] : memref<1x32x96xbf16, #tpu.memory_space<vmem>>, vector<1x32x96xbf16>
    %32 = vector.shape_cast %31 : vector<1x32x96xbf16> to vector<32x96xbf16>
    %cst_15 = arith.constant dense<0.000000e+00> : vector<8x96xf32>
    %33 = tpu.matmul %30, %32, %cst_15 {dimension_numbers = #tpu.dot_dimension_numbers<[1], [0], [0], [1], [0, 0, 1, 1], [], []>} : vector<8x32xbf16>, vector<32x96xbf16>, vector<8x96xf32> -> vector<8x96xf32>
    %c0_16 = arith.constant 0 : index
    %c0_17 = arith.constant 0 : index
    %c0_18 = arith.constant 0 : index
    %34 = vector.load %arg6[%c0_16, %c0_17, %c0_18] : memref<1x1x96xf32, #tpu.memory_space<vmem>>, vector<1x1x96xf32>
    %35 = vector.shape_cast %34 : vector<1x1x96xf32> to vector<1x96xf32>
    %36 = vector.broadcast %35 : vector<1x96xf32> to vector<8x96xf32>
    %37 = arith.addf %33, %36 : vector<8x96xf32>
    %38 = vector.extract_strided_slice %37 {offsets = [0, 0], sizes = [8, 8], strides = [1, 1]} : vector<8x96xf32> to vector<8x8xf32>
    %39 = vector.extract_strided_slice %37 {offsets = [0, 8], sizes = [8, 8], strides = [1, 1]} : vector<8x96xf32> to vector<8x8xf32>
    %40 = vector.extract_strided_slice %37 {offsets = [0, 16], sizes = [8, 8], strides = [1, 1]} : vector<8x96xf32> to vector<8x8xf32>
    %41 = vector.extract_strided_slice %37 {offsets = [0, 24], sizes = [8, 8], strides = [1, 1]} : vector<8x96xf32> to vector<8x8xf32>
    %42 = vector.shape_cast %38 : vector<8x8xf32> to vector<1x8x8xf32>
    %43 = vector.shape_cast %39 : vector<8x8xf32> to vector<1x8x8xf32>
    %44 = vector.shape_cast %40 : vector<8x8xf32> to vector<1x8x8xf32>
    %45 = vector.shape_cast %41 : vector<8x8xf32> to vector<1x8x8xf32>
    %46 = tpu.concatenate %42, %43, %44, %45 in 0 : vector<1x8x8xf32>, vector<1x8x8xf32>, vector<1x8x8xf32>, vector<1x8x8xf32> -> vector<4x8x8xf32>
    %47 = arith.truncf %46 : vector<4x8x8xf32> to vector<4x8x8xbf16>
    %48 = vector.extract_strided_slice %37 {offsets = [0, 32], sizes = [8, 8], strides = [1, 1]} : vector<8x96xf32> to vector<8x8xf32>
    %49 = vector.extract_strided_slice %37 {offsets = [0, 40], sizes = [8, 8], strides = [1, 1]} : vector<8x96xf32> to vector<8x8xf32>
    %50 = vector.extract_strided_slice %37 {offsets = [0, 48], sizes = [8, 8], strides = [1, 1]} : vector<8x96xf32> to vector<8x8xf32>
    %51 = vector.extract_strided_slice %37 {offsets = [0, 56], sizes = [8, 8], strides = [1, 1]} : vector<8x96xf32> to vector<8x8xf32>
    %52 = vector.shape_cast %48 : vector<8x8xf32> to vector<1x8x8xf32>
    %53 = vector.shape_cast %49 : vector<8x8xf32> to vector<1x8x8xf32>
    %54 = vector.shape_cast %50 : vector<8x8xf32> to vector<1x8x8xf32>
    %55 = vector.shape_cast %51 : vector<8x8xf32> to vector<1x8x8xf32>
    %56 = tpu.concatenate %52, %53, %54, %55 in 0 : vector<1x8x8xf32>, vector<1x8x8xf32>, vector<1x8x8xf32>, vector<1x8x8xf32> -> vector<4x8x8xf32>
    %57 = arith.truncf %56 : vector<4x8x8xf32> to vector<4x8x8xbf16>
    %58 = vector.extract_strided_slice %37 {offsets = [0, 64], sizes = [8, 8], strides = [1, 1]} : vector<8x96xf32> to vector<8x8xf32>
    %59 = vector.extract_strided_slice %37 {offsets = [0, 72], sizes = [8, 8], strides = [1, 1]} : vector<8x96xf32> to vector<8x8xf32>
    %60 = vector.extract_strided_slice %37 {offsets = [0, 80], sizes = [8, 8], strides = [1, 1]} : vector<8x96xf32> to vector<8x8xf32>
    %61 = vector.extract_strided_slice %37 {offsets = [0, 88], sizes = [8, 8], strides = [1, 1]} : vector<8x96xf32> to vector<8x8xf32>
    %62 = vector.shape_cast %58 : vector<8x8xf32> to vector<1x8x8xf32>
    %63 = vector.shape_cast %59 : vector<8x8xf32> to vector<1x8x8xf32>
    %64 = vector.shape_cast %60 : vector<8x8xf32> to vector<1x8x8xf32>
    %65 = vector.shape_cast %61 : vector<8x8xf32> to vector<1x8x8xf32>
    %66 = tpu.concatenate %62, %63, %64, %65 in 0 : vector<1x8x8xf32>, vector<1x8x8xf32>, vector<1x8x8xf32>, vector<1x8x8xf32> -> vector<4x8x8xf32>
    %67 = arith.truncf %66 : vector<4x8x8xf32> to vector<4x8x8xbf16>
    %68 = tpu.iota {dimensions = array<i32: 0>} : vector<8x8xi32>
    %69 = tpu.iota {dimensions = array<i32: 1>} : vector<8x8xi32>
    %70 = arith.cmpi sle, %69, %68 : vector<8x8xi32>
    %cst_19 = arith.constant 0.000000e+00 : f32
    %cst_20 = arith.constant -1.000000e+30 : f32
    %71 = vector.broadcast %cst_19 : f32 to vector<8x8xf32>
    %72 = vector.broadcast %cst_20 : f32 to vector<8x8xf32>
    %73 = arith.select %70, %71, %72 : vector<8x8xi1>, vector<8x8xf32>
    "tpu.trace_start"() <{level = 10 : i32, message = "hqd,hkd->hqk"}> : () -> ()
    %cst_21 = arith.constant dense<0.000000e+00> : vector<4x8x8xf32>
    %74 = tpu.matmul %47, %57, %cst_21 {dimension_numbers = #tpu.dot_dimension_numbers<[2], [2], [1], [1], [0, 0, 0, 1, 1, 1], [0], [0]>} : vector<4x8x8xbf16>, vector<4x8x8xbf16>, vector<4x8x8xf32> -> vector<4x8x8xf32>
    "tpu.trace_stop"() : () -> ()
    %cst_22 = arith.constant 0.353553385 : f32
    %75 = vector.broadcast %cst_22 : f32 to vector<4x8x8xf32>
    %76 = arith.mulf %74, %75 : vector<4x8x8xf32>
    %77 = vector.shape_cast %73 : vector<8x8xf32> to vector<1x8x8xf32>
    %78 = vector.broadcast %77 : vector<1x8x8xf32> to vector<4x8x8xf32>
    %79 = arith.addf %76, %78 : vector<4x8x8xf32>
    %cst_23 = arith.constant dense<0xFF800000> : vector<4x8xf32>
    %80 = vector.multi_reduction <maximumf>, %79, %cst_23 [2] : vector<4x8x8xf32> to vector<4x8xf32>
    %81 = vector.shape_cast %80 : vector<4x8xf32> to vector<4x8x1xf32>
    %82 = vector.broadcast %81 : vector<4x8x1xf32> to vector<4x8x8xf32>
    %83 = arith.subf %79, %82 : vector<4x8x8xf32>
    %84 = math.exp %83 : vector<4x8x8xf32>
    %cst_24 = arith.constant dense<0.000000e+00> : vector<4x8xf32>
    %85 = vector.multi_reduction <add>, %84, %cst_24 [2] : vector<4x8x8xf32> to vector<4x8xf32>
    %86 = vector.shape_cast %85 : vector<4x8xf32> to vector<4x8x1xf32>
    %87 = arith.truncf %84 : vector<4x8x8xf32> to vector<4x8x8xbf16>
    "tpu.trace_start"() <{level = 10 : i32, message = "hqk,hkd->hqd"}> : () -> ()
    %cst_25 = arith.constant dense<0.000000e+00> : vector<4x8x8xf32>
    %88 = tpu.matmul %87, %67, %cst_25 {dimension_numbers = #tpu.dot_dimension_numbers<[2], [1], [1], [2], [0, 0, 0, 1, 1, 2], [0], [0]>} : vector<4x8x8xbf16>, vector<4x8x8xbf16>, vector<4x8x8xf32> -> vector<4x8x8xf32>
    "tpu.trace_stop"() : () -> ()
    %89 = tpu.reciprocal %86 : vector<4x8x1xf32> -> vector<4x8x1xf32>
    %90 = vector.broadcast %89 : vector<4x8x1xf32> to vector<4x8x8xf32>
    %91 = arith.mulf %88, %90 : vector<4x8x8xf32>
    %92 = vector.extract_strided_slice %91 {offsets = [0, 0, 0], sizes = [1, 8, 8], strides = [1, 1, 1]} : vector<4x8x8xf32> to vector<1x8x8xf32>
    %93 = vector.shape_cast %92 : vector<1x8x8xf32> to vector<8x8xf32>
    %94 = vector.extract_strided_slice %91 {offsets = [1, 0, 0], sizes = [1, 8, 8], strides = [1, 1, 1]} : vector<4x8x8xf32> to vector<1x8x8xf32>
    %95 = vector.shape_cast %94 : vector<1x8x8xf32> to vector<8x8xf32>
    %96 = vector.extract_strided_slice %91 {offsets = [2, 0, 0], sizes = [1, 8, 8], strides = [1, 1, 1]} : vector<4x8x8xf32> to vector<1x8x8xf32>
    %97 = vector.shape_cast %96 : vector<1x8x8xf32> to vector<8x8xf32>
    %98 = vector.extract_strided_slice %91 {offsets = [3, 0, 0], sizes = [1, 8, 8], strides = [1, 1, 1]} : vector<4x8x8xf32> to vector<1x8x8xf32>
    %99 = vector.shape_cast %98 : vector<1x8x8xf32> to vector<8x8xf32>
    %100 = tpu.concatenate %93, %95, %97, %99 in 1 : vector<8x8xf32>, vector<8x8xf32>, vector<8x8xf32>, vector<8x8xf32> -> vector<8x32xf32>
    %101 = arith.truncf %100 : vector<8x32xf32> to vector<8x32xbf16>
    %c0_26 = arith.constant 0 : index
    %c0_27 = arith.constant 0 : index
    %c0_28 = arith.constant 0 : index
    %102 = vector.load %arg7[%c0_26, %c0_27, %c0_28] : memref<1x32x32xbf16, #tpu.memory_space<vmem>>, vector<1x32x32xbf16>
    %103 = vector.shape_cast %102 : vector<1x32x32xbf16> to vector<32x32xbf16>
    %cst_29 = arith.constant dense<0.000000e+00> : vector<8x32xf32>
    %104 = tpu.matmul %101, %103, %cst_29 {dimension_numbers = #tpu.dot_dimension_numbers<[1], [0], [0], [1], [0, 0, 1, 1], [], []>} : vector<8x32xbf16>, vector<32x32xbf16>, vector<8x32xf32> -> vector<8x32xf32>
    %105 = arith.addf %3, %104 : vector<8x32xf32>
    %c0_30 = arith.constant 0 : index
    %c0_31 = arith.constant 0 : index
    %c0_32 = arith.constant 0 : index
    %106 = vector.load %arg8[%c0_30, %c0_31, %c0_32] : memref<1x1x32xf32, #tpu.memory_space<vmem>>, vector<1x1x32xf32>
    %107 = vector.shape_cast %106 : vector<1x1x32xf32> to vector<1x32xf32>
    %108 = vector.broadcast %107 : vector<1x32xf32> to vector<8x32xf32>
    %109 = arith.addf %105, %108 : vector<8x32xf32>
    %c0_33 = arith.constant 0 : index
    %c0_34 = arith.constant 0 : index
    %c0_35 = arith.constant 0 : index
    %110 = vector.load %arg9[%c0_33, %c0_34, %c0_35] : memref<1x1x32xf32, #tpu.memory_space<vmem>>, vector<1x1x32xf32>
    %111 = vector.shape_cast %110 : vector<1x1x32xf32> to vector<1x32xf32>
    %c0_36 = arith.constant 0 : index
    %c0_37 = arith.constant 0 : index
    %c0_38 = arith.constant 0 : index
    %112 = vector.load %arg10[%c0_36, %c0_37, %c0_38] : memref<1x1x32xf32, #tpu.memory_space<vmem>>, vector<1x1x32xf32>
    %113 = vector.shape_cast %112 : vector<1x1x32xf32> to vector<1x32xf32>
    %cst_39 = arith.constant dense<0.000000e+00> : vector<8xf32>
    %114 = vector.multi_reduction <add>, %109, %cst_39 [1] : vector<8x32xf32> to vector<8xf32>
    %115 = vector.shape_cast %114 : vector<8xf32> to vector<8x1xf32>
    %cst_40 = arith.constant 3.200000e+01 : f32
    %116 = vector.broadcast %cst_40 : f32 to vector<8x1xf32>
    %117 = arith.divf %115, %116 : vector<8x1xf32>
    %118 = vector.broadcast %117 : vector<8x1xf32> to vector<8x32xf32>
    %119 = arith.subf %109, %118 : vector<8x32xf32>
    %120 = arith.mulf %119, %119 : vector<8x32xf32>
    %cst_41 = arith.constant dense<0.000000e+00> : vector<8xf32>
    %121 = vector.multi_reduction <add>, %120, %cst_41 [1] : vector<8x32xf32> to vector<8xf32>
    %122 = vector.shape_cast %121 : vector<8xf32> to vector<8x1xf32>
    %cst_42 = arith.constant 3.200000e+01 : f32
    %123 = vector.broadcast %cst_42 : f32 to vector<8x1xf32>
    %124 = arith.divf %122, %123 : vector<8x1xf32>
    %125 = vector.broadcast %117 : vector<8x1xf32> to vector<8x32xf32>
    %126 = arith.subf %109, %125 : vector<8x32xf32>
    %cst_43 = arith.constant 9.99999974E-6 : f32
    %127 = vector.broadcast %cst_43 : f32 to vector<8x1xf32>
    %128 = arith.addf %124, %127 : vector<8x1xf32>
    %129 = math.rsqrt %128 : vector<8x1xf32>
    %130 = vector.broadcast %129 : vector<8x1xf32> to vector<8x32xf32>
    %131 = arith.mulf %126, %130 : vector<8x32xf32>
    %132 = vector.broadcast %111 : vector<1x32xf32> to vector<8x32xf32>
    %133 = arith.mulf %131, %132 : vector<8x32xf32>
    %134 = vector.broadcast %113 : vector<1x32xf32> to vector<8x32xf32>
    %135 = arith.addf %133, %134 : vector<8x32xf32>
    %136 = arith.truncf %135 : vector<8x32xf32> to vector<8x32xbf16>
    %c0_44 = arith.constant 0 : index
    %c0_45 = arith.constant 0 : index
    %c0_46 = arith.constant 0 : index
    %137 = vector.load %arg11[%c0_44, %c0_45, %c0_46] : memref<1x32x64xbf16, #tpu.memory_space<vmem>>, vector<1x32x64xbf16>
    %138 = vector.shape_cast %137 : vector<1x32x64xbf16> to vector<32x64xbf16>
    %cst_47 = arith.constant dense<0.000000e+00> : vector<8x64xf32>
    %139 = tpu.matmul %136, %138, %cst_47 {dimension_numbers = #tpu.dot_dimension_numbers<[1], [0], [0], [1], [0, 0, 1, 1], [], []>} : vector<8x32xbf16>, vector<32x64xbf16>, vector<8x64xf32> -> vector<8x64xf32>
    %c0_48 = arith.constant 0 : index
    %c0_49 = arith.constant 0 : index
    %c0_50 = arith.constant 0 : index
    %140 = vector.load %arg12[%c0_48, %c0_49, %c0_50] : memref<1x1x64xf32, #tpu.memory_space<vmem>>, vector<1x1x64xf32>
    %141 = vector.shape_cast %140 : vector<1x1x64xf32> to vector<1x64xf32>
    %142 = vector.broadcast %141 : vector<1x64xf32> to vector<8x64xf32>
    %143 = arith.addf %139, %142 : vector<8x64xf32>
    %144 = arith.mulf %143, %143 : vector<8x64xf32>
    %145 = arith.mulf %143, %144 : vector<8x64xf32>
    %cst_51 = arith.constant 4.471500e-02 : f32
    %146 = vector.broadcast %cst_51 : f32 to vector<8x64xf32>
    %147 = arith.mulf %146, %145 : vector<8x64xf32>
    %148 = arith.addf %143, %147 : vector<8x64xf32>
    %cst_52 = arith.constant 0.797884583 : f32
    %149 = vector.broadcast %cst_52 : f32 to vector<8x64xf32>
    %150 = arith.mulf %149, %148 : vector<8x64xf32>
    %151 = math.tanh %150 : vector<8x64xf32>
    %cst_53 = arith.constant 1.000000e+00 : f32
    %152 = vector.broadcast %cst_53 : f32 to vector<8x64xf32>
    %153 = arith.addf %152, %151 : vector<8x64xf32>
    %cst_54 = arith.constant 5.000000e-01 : f32
    %154 = vector.broadcast %cst_54 : f32 to vector<8x64xf32>
    %155 = arith.mulf %154, %153 : vector<8x64xf32>
    %156 = arith.mulf %143, %155 : vector<8x64xf32>
    %157 = arith.truncf %156 : vector<8x64xf32> to vector<8x64xbf16>
    %c0_55 = arith.constant 0 : index
    %c0_56 = arith.constant 0 : index
    %c0_57 = arith.constant 0 : index
    %158 = vector.load %arg13[%c0_55, %c0_56, %c0_57] : memref<1x64x32xbf16, #tpu.memory_space<vmem>>, vector<1x64x32xbf16>
    %159 = vector.shape_cast %158 : vector<1x64x32xbf16> to vector<64x32xbf16>
    %cst_58 = arith.constant dense<0.000000e+00> : vector<8x32xf32>
    %160 = tpu.matmul %157, %159, %cst_58 {dimension_numbers = #tpu.dot_dimension_numbers<[1], [0], [0], [1], [0, 0, 1, 1], [], []>} : vector<8x64xbf16>, vector<64x32xbf16>, vector<8x32xf32> -> vector<8x32xf32>
    %161 = arith.addf %109, %160 : vector<8x32xf32>
    %c0_59 = arith.constant 0 : index
    %c0_60 = arith.constant 0 : index
    %c0_61 = arith.constant 0 : index
    %162 = vector.load %arg14[%c0_59, %c0_60, %c0_61] : memref<1x1x32xf32, #tpu.memory_space<vmem>>, vector<1x1x32xf32>
    %163 = vector.shape_cast %162 : vector<1x1x32xf32> to vector<1x32xf32>
    %164 = vector.broadcast %163 : vector<1x32xf32> to vector<8x32xf32>
    %165 = arith.addf %161, %164 : vector<8x32xf32>
    %c0_62 = arith.constant 0 : index
    %c0_63 = arith.constant 0 : index
    %166 = vector.load %arg16[%c0_62, %c0_63] : memref<8x32xf32, #tpu.memory_space<vmem>>, vector<8x32xf32>
    tpu.vector_store %arg16[%c0_62, %c0_63], %165 {strides = array<i32>} : memref<8x32xf32, #tpu.memory_space<vmem>>, vector<8x32xf32>,
    %c1_i32 = arith.constant 1 : i32
    %167 = arith.cmpi eq, %arg1, %c1_i32 : i32
    %168 = arith.extui %167 : i1 to i32
    %c0_i32_64 = arith.constant 0 : i32
    %169 = arith.cmpi ne, %168, %c0_i32_64 : i32
    scf.if %169 {
      %170 = arith.truncf %165 : vector<8x32xf32> to vector<8x32xbf16>
      %c0_65 = arith.constant 0 : index
      %c0_66 = arith.constant 0 : index
      %c0_67 = arith.constant 0 : index
      %171 = vector.load %arg15[%c0_65, %c0_66, %c0_67] : memref<1x8x32xbf16, #tpu.memory_space<vmem>>, vector<1x8x32xbf16>
      %172 = vector.shape_cast %171 : vector<1x8x32xbf16> to vector<8x32xbf16>
      %173 = vector.shape_cast %170 : vector<8x32xbf16> to vector<1x8x32xbf16>
      tpu.vector_store %arg15[%c0_65, %c0_66, %c0_67], %173 {strides = array<i32>} : memref<1x8x32xbf16, #tpu.memory_space<vmem>>, vector<1x8x32xbf16>,
    } else {
    }
    return
  }
  func.func @transform_0(%arg0: i32, %arg1: i32) -> (i32, i32, i32) {
    %c0_i32 = arith.constant 0 : i32
    %c0_i32_0 = arith.constant 0 : i32
    %c0_i32_1 = arith.constant 0 : i32
    return %arg0, %c0_i32, %c0_i32_0 : i32, i32, i32
  }
  func.func @transform_1(%arg0: i32, %arg1: i32) -> (i32, i32, i32) {
    %c0_i32 = arith.constant 0 : i32
    %c0_i32_0 = arith.constant 0 : i32
    %c0_i32_1 = arith.constant 0 : i32
    return %arg1, %c0_i32, %c0_i32_0 : i32, i32, i32
  }
  func.func @transform_2(%arg0: i32, %arg1: i32) -> (i32, i32, i32) {
    %c0_i32 = arith.constant 0 : i32
    %c0_i32_0 = arith.constant 0 : i32
    %c0_i32_1 = arith.constant 0 : i32
    return %arg1, %c0_i32, %c0_i32_0 : i32, i32, i32
  }
  func.func @transform_3(%arg0: i32, %arg1: i32) -> (i32, i32, i32) {
    %c0_i32 = arith.constant 0 : i32
    %c0_i32_0 = arith.constant 0 : i32
    %c0_i32_1 = arith.constant 0 : i32
    return %arg1, %c0_i32, %c0_i32_0 : i32, i32, i32
  }
  func.func @transform_4(%arg0: i32, %arg1: i32) -> (i32, i32, i32) {
    %c0_i32 = arith.constant 0 : i32
    %c0_i32_0 = arith.constant 0 : i32
    %c0_i32_1 = arith.constant 0 : i32
    return %arg1, %c0_i32, %c0_i32_0 : i32, i32, i32
  }
  func.func @transform_5(%arg0: i32, %arg1: i32) -> (i32, i32, i32) {
    %c0_i32 = arith.constant 0 : i32
    %c0_i32_0 = arith.constant 0 : i32
    %c0_i32_1 = arith.constant 0 : i32
    return %arg1, %c0_i32, %c0_i32_0 : i32, i32, i32
  }
  func.func @transform_6(%arg0: i32, %arg1: i32) -> (i32, i32, i32) {
    %c0_i32 = arith.constant 0 : i32
    %c0_i32_0 = arith.constant 0 : i32
    %c0_i32_1 = arith.constant 0 : i32
    return %arg1, %c0_i32, %c0_i32_0 : i32, i32, i32
  }
  func.func @transform_7(%arg0: i32, %arg1: i32) -> (i32, i32, i32) {
    %c0_i32 = arith.constant 0 : i32
    %c0_i32_0 = arith.constant 0 : i32
    %c0_i32_1 = arith.constant 0 : i32
    return %arg1, %c0_i32, %c0_i32_0 : i32, i32, i32
  }
  func.func @transform_8(%arg0: i32, %arg1: i32) -> (i32, i32, i32) {
    %c0_i32 = arith.constant 0 : i32
    %c0_i32_0 = arith.constant 0 : i32
    %c0_i32_1 = arith.constant 0 : i32
    return %arg1, %c0_i32, %c0_i32_0 : i32, i32, i32
  }
  func.func @transform_9(%arg0: i32, %arg1: i32) -> (i32, i32, i32) {
    %c0_i32 = arith.constant 0 : i32
    %c0_i32_0 = arith.constant 0 : i32
    %c0_i32_1 = arith.constant 0 : i32
    return %arg1, %c0_i32, %c0_i32_0 : i32, i32, i32
  }
  func.func @transform_10(%arg0: i32, %arg1: i32) -> (i32, i32, i32) {
    %c0_i32 = arith.constant 0 : i32
    %c0_i32_0 = arith.constant 0 : i32
    %c0_i32_1 = arith.constant 0 : i32
    return %arg1, %c0_i32, %c0_i32_0 : i32, i32, i32
  }
  func.func @transform_11(%arg0: i32, %arg1: i32) -> (i32, i32, i32) {
    %c0_i32 = arith.constant 0 : i32
    %c0_i32_0 = arith.constant 0 : i32
    %c0_i32_1 = arith.constant 0 : i32
    return %arg1, %c0_i32, %c0_i32_0 : i32, i32, i32
  }
  func.func @transform_12(%arg0: i32, %arg1: i32) -> (i32, i32, i32) {
    %c0_i32 = arith.constant 0 : i32
    %c0_i32_0 = arith.constant 0 : i32
    %c0_i32_1 = arith.constant 0 : i32
    return %arg1, %c0_i32, %c0_i32_0 : i32, i32, i32
  }
  func.func @transform_13(%arg0: i32, %arg1: i32) -> (i32, i32, i32) {
    %c0_i32 = arith.constant 0 : i32
    %c0_i32_0 = arith.constant 0 : i32
    %c0_i32_1 = arith.constant 0 : i32
    return %arg0, %c0_i32, %c0_i32_0 : i32, i32, i32
  }
}

module attributes {stable_mosaic.version = 11 : i64} {
  func.func @head_kernel(%arg0: i32, %arg1: i32, %arg2: memref<1x8x32xbf16, #tpu.memory_space<vmem>>, %arg3: memref<1x32xf32, #tpu.memory_space<vmem>>, %arg4: memref<1x32xf32, #tpu.memory_space<vmem>>, %arg5: memref<128x32xbf16, #tpu.memory_space<vmem>>, %arg6: memref<1x8x128xf32, #tpu.memory_space<vmem>>, %arg7: memref<8x32xbf16, #tpu.memory_space<vmem>>) attributes {dimension_semantics = [#tpu.dimension_semantics<parallel>, #tpu.dimension_semantics<arbitrary>], iteration_bounds = array<i64: 4, 1>, scalar_prefetch = 0 : i64, scratch_operands = 1 : i64, tpu.core_type = #tpu.core_type<tc>, window_params = [{transform_indices = @transform_0, window_bounds = array<i64: 1, 8, 32>}, {pipeline_mode = #tpu.pipeline_mode<synchronous>, transform_indices = @transform_1, window_bounds = array<i64: 1, 32>}, {pipeline_mode = #tpu.pipeline_mode<synchronous>, transform_indices = @transform_2, window_bounds = array<i64: 1, 32>}, {transform_indices = @transform_3, window_bounds = array<i64: 128, 32>}, {transform_indices = @transform_4, window_bounds = array<i64: 1, 8, 128>}]} {
    %c0_i32 = arith.constant 0 : i32
    %0 = arith.cmpi eq, %arg1, %c0_i32 : i32
    %1 = arith.extui %0 : i1 to i32
    %c0_i32_0 = arith.constant 0 : i32
    %2 = arith.cmpi ne, %1, %c0_i32_0 : i32
    scf.if %2 {
      %c0_7 = arith.constant 0 : index
      %c0_8 = arith.constant 0 : index
      %c0_9 = arith.constant 0 : index
      %9 = vector.load %arg2[%c0_7, %c0_8, %c0_9] : memref<1x8x32xbf16, #tpu.memory_space<vmem>>, vector<1x8x32xbf16>
      %10 = vector.shape_cast %9 : vector<1x8x32xbf16> to vector<8x32xbf16>
      %11 = arith.extf %10 : vector<8x32xbf16> to vector<8x32xf32>
      %c0_10 = arith.constant 0 : index
      %c0_11 = arith.constant 0 : index
      %12 = vector.load %arg3[%c0_10, %c0_11] : memref<1x32xf32, #tpu.memory_space<vmem>>, vector<1x32xf32>
      %c0_12 = arith.constant 0 : index
      %c0_13 = arith.constant 0 : index
      %13 = vector.load %arg4[%c0_12, %c0_13] : memref<1x32xf32, #tpu.memory_space<vmem>>, vector<1x32xf32>
      %cst_14 = arith.constant dense<0.000000e+00> : vector<8xf32>
      %14 = vector.multi_reduction <add>, %11, %cst_14 [1] : vector<8x32xf32> to vector<8xf32>
      %15 = vector.shape_cast %14 : vector<8xf32> to vector<8x1xf32>
      %cst_15 = arith.constant 3.200000e+01 : f32
      %16 = vector.broadcast %cst_15 : f32 to vector<8x1xf32>
      %17 = arith.divf %15, %16 : vector<8x1xf32>
      %18 = vector.broadcast %17 : vector<8x1xf32> to vector<8x32xf32>
      %19 = arith.subf %11, %18 : vector<8x32xf32>
      %20 = arith.mulf %19, %19 : vector<8x32xf32>
      %cst_16 = arith.constant dense<0.000000e+00> : vector<8xf32>
      %21 = vector.multi_reduction <add>, %20, %cst_16 [1] : vector<8x32xf32> to vector<8xf32>
      %22 = vector.shape_cast %21 : vector<8xf32> to vector<8x1xf32>
      %cst_17 = arith.constant 3.200000e+01 : f32
      %23 = vector.broadcast %cst_17 : f32 to vector<8x1xf32>
      %24 = arith.divf %22, %23 : vector<8x1xf32>
      %25 = vector.broadcast %17 : vector<8x1xf32> to vector<8x32xf32>
      %26 = arith.subf %11, %25 : vector<8x32xf32>
      %cst_18 = arith.constant 9.99999974E-6 : f32
      %27 = vector.broadcast %cst_18 : f32 to vector<8x1xf32>
      %28 = arith.addf %24, %27 : vector<8x1xf32>
      %29 = math.rsqrt %28 : vector<8x1xf32>
      %30 = vector.broadcast %29 : vector<8x1xf32> to vector<8x32xf32>
      %31 = arith.mulf %26, %30 : vector<8x32xf32>
      %32 = vector.broadcast %12 : vector<1x32xf32> to vector<8x32xf32>
      %33 = arith.mulf %31, %32 : vector<8x32xf32>
      %34 = vector.broadcast %13 : vector<1x32xf32> to vector<8x32xf32>
      %35 = arith.addf %33, %34 : vector<8x32xf32>
      %36 = arith.truncf %35 : vector<8x32xf32> to vector<8x32xbf16>
      %c0_19 = arith.constant 0 : index
      %c0_20 = arith.constant 0 : index
      %37 = vector.load %arg7[%c0_19, %c0_20] : memref<8x32xbf16, #tpu.memory_space<vmem>>, vector<8x32xbf16>
      tpu.vector_store %arg7[%c0_19, %c0_20], %36 {strides = array<i32>} : memref<8x32xbf16, #tpu.memory_space<vmem>>, vector<8x32xbf16>,
    } else {
    }
    %c0 = arith.constant 0 : index
    %c0_1 = arith.constant 0 : index
    %3 = vector.load %arg7[%c0, %c0_1] : memref<8x32xbf16, #tpu.memory_space<vmem>>, vector<8x32xbf16>
    %c0_2 = arith.constant 0 : index
    %c0_3 = arith.constant 0 : index
    %4 = vector.load %arg5[%c0_2, %c0_3] : memref<128x32xbf16, #tpu.memory_space<vmem>>, vector<128x32xbf16>
    %cst = arith.constant dense<0.000000e+00> : vector<8x128xf32>
    %5 = tpu.matmul %3, %4, %cst {dimension_numbers = #tpu.dot_dimension_numbers<[1], [1], [0], [0], [0, 0, 1, 0], [], []>} : vector<8x32xbf16>, vector<128x32xbf16>, vector<8x128xf32> -> vector<8x128xf32>
    %c0_4 = arith.constant 0 : index
    %c0_5 = arith.constant 0 : index
    %c0_6 = arith.constant 0 : index
    %6 = vector.load %arg6[%c0_4, %c0_5, %c0_6] : memref<1x8x128xf32, #tpu.memory_space<vmem>>, vector<1x8x128xf32>
    %7 = vector.shape_cast %6 : vector<1x8x128xf32> to vector<8x128xf32>
    %8 = vector.shape_cast %5 : vector<8x128xf32> to vector<1x8x128xf32>
    tpu.vector_store %arg6[%c0_4, %c0_5, %c0_6], %8 {strides = array<i32>} : memref<1x8x128xf32, #tpu.memory_space<vmem>>, vector<1x8x128xf32>,
    return
  }
  func.func @transform_0(%arg0: i32, %arg1: i32) -> (i32, i32, i32) {
    %c0_i32 = arith.constant 0 : i32
    %c0_i32_0 = arith.constant 0 : i32
    %c0_i32_1 = arith.constant 0 : i32
    return %arg0, %c0_i32, %c0_i32_0 : i32, i32, i32
  }
  func.func @transform_1(%arg0: i32, %arg1: i32) -> (i32, i32) {
    %c0_i32 = arith.constant 0 : i32
    %c0_i32_0 = arith.constant 0 : i32
    %c0_i32_1 = arith.constant 0 : i32
    return %c0_i32, %c0_i32_0 : i32, i32
  }
  func.func @transform_2(%arg0: i32, %arg1: i32) -> (i32, i32) {
    %c0_i32 = arith.constant 0 : i32
    %c0_i32_0 = arith.constant 0 : i32
    %c0_i32_1 = arith.constant 0 : i32
    return %c0_i32, %c0_i32_0 : i32, i32
  }
  func.func @transform_3(%arg0: i32, %arg1: i32) -> (i32, i32) {
    %c0_i32 = arith.constant 0 : i32
    %c0_i32_0 = arith.constant 0 : i32
    return %arg1, %c0_i32 : i32, i32
  }
  func.func @transform_4(%arg0: i32, %arg1: i32) -> (i32, i32, i32) {
    %c0_i32 = arith.constant 0 : i32
    %c0_i32_0 = arith.constant 0 : i32
    return %arg0, %c0_i32, %arg1 : i32, i32, i32
  }
}

</mosaic_0001>

<llo_original>
// kernel: _lambda_.3
$region0: #{_lambda_.3}
  #allocation0 [shape = 'u32[]', space=smem, size = 0x4, offset = 0x4, fixed_abs, tag = 'smem constant byte address 0x4 - core index']
  #allocation1 [shape = 'u32[144,128]{1,0:T(1,128)}', space=vmem, size = 0x12000, scoped, tag = 'internal scratch']
  #allocation2 [shape = 'bf16[8,32]{1,0:T(8,128)(2,1)}', space=vmem, size = 0x800, scoped, tag = 'scratch operand']
  %s0 = inlined_call_operand.vmem [shape: bf16[4,8,32], index: 0, kind: input, shape index: {}]
  %s1 = inlined_call_operand.vmem [shape: f32[1,32], index: 1, kind: input, shape index: {}]
  %s2 = inlined_call_operand.vmem [shape: f32[1,32], index: 2, kind: input, shape index: {}]
  %s3 = inlined_call_operand.vmem [shape: bf16[128,32], index: 3, kind: input, shape index: {}]
  %s4 = inlined_call_operand.hbm [shape: f32[4,8,128], index: 4, kind: output, shape index: {}]
  %s5 = sld [smem:[#allocation0]]
  $region53: #{_lambda_.3} parent=0
    _
  %s7 = ssub.s32 1, %s5
  %s8 = scalar_select 0, %s7, %s5
  $region1: #{_lambda_.3} parent=0
    #allocation3 [shape = 'u8[8192]{0}', space=vmem, size = 0x2000, scoped, tag = 'output window, operand 0']
    #allocation4 [shape = 's32[2]{0}', space=sflag, size = 0x8, scoped, tag = 'scoped memory for _lambda_.3']
    %9 = vsyncpa [#allocation4], 0
    %s10 = scalar_lea.sflag [#allocation4], 1
    %11 = vsyncpa %s10, 0
    loop: start=0, step=1, limit=6
    $region2: #{_lambda_.3} parent=1 // loop_pre_header
      _
    $region3: #{_lambda_.3} parent=1 // loop_header
      %s13 = sphi 0, %s17
      %p14 = scmp.ge.s32.totalorder %s13, 6
      %s20 = sphi 0, %s32
      %s21 = sphi 0, %s28
      %s22 = sphi 0, %s20
      %s23 = sphi 0, %s21
      %s24 = sphi 0, %s22
      %s25 = sphi 0, %s23
      %s35 = sphi 0, %s37
      %s38 = sphi 0, %s35
      %s39 = sphi 0, %s38
      %s55 = sphi 0, %s39
      %s59 = sphi 0, %s59
      %s61 = sphi 0, %s59
      %s62 = sphi 0, %s61
      %s76 = sphi 0, %s62
      %s80 = sphi 0, %s80
      %s82 = sphi 0, %s80
      %s83 = sphi 0, %s82
      %s97 = sphi 0, %s83
      %s103 = sphi 0, %s105
      %s106 = sphi 0, %s103
      %s107 = sphi 0, %s106
      %s123 = sphi 0, %s107
      %s131 = sphi 0, %s133
      %s134 = sphi 0, %s131
      %s135 = sphi 0, %s134
      %s151 = sphi 0, %s135
    $region4: #{_lambda_.3} parent=1 // loop_header_branch
      %16 = sbr.rel (%p14) target = $region8
    $region5: #{_lambda_.3} parent=1 // loop_body
      %s18 = ssub.s32 %s13, 1
      %s19 = ssub.s32 %s13, 2
      %s26 = sadd.s32 1, %s21
      %p27 = scmp.ge.s32.totalorder %s26, 1
      %s28 = scalar_select %p27, 0, %s26
      %s29 = sadd.s32 1, %s20
      %s30 = scalar_select %p27, %s29, %s20
      %p31 = scmp.ge.s32.totalorder %s30, 4
      %s32 = scalar_select %p31, 0, %s30
      %s33 = ssub.s32 %s20, %s32
      %p34 = scmp.eq.s32.totalorder %s33, 0
      %s36 = sadd.s32 %s35, 1
      %s37 = scalar_select %p34, %s35, %s36
      %p40 = pneg %p34
      %p41 = scmp.eq.s32.totalorder %s13, 3
      %p42 = por %p40, %p41
      %p43 = scmp.ne.s32.totalorder %s35, %s38
      %p44 = scmp.eq.s32.totalorder %s13, 0
      %p45 = por %p43, %p44
      %p46 = scmp.ne.s32.totalorder %s35, %s38
      %p47 = scmp.eq.s32.totalorder %s18, 3
      %p48 = por %p46, %p47
      %p49 = scmp.ne.s32.totalorder %s38, %s39
      %p50 = scmp.eq.s32.totalorder %s18, 0
      %p51 = por %p49, %p50
      %p52 = scmp.ne.s32.totalorder %s38, %s39
      %p53 = scmp.eq.s32.totalorder %s19, 3
      %p54 = por %p52, %p53
      %p56 = scmp.ne.s32.totalorder %s39, %s55
      %p57 = scmp.eq.s32.totalorder %s19, 0
      %p58 = por %p56, %p57
      %s60 = sadd.s32 %s59, 1
      %p63 = scmp.eq.s32.totalorder %s13, 3
      %p64 = scmp.ne.s32.totalorder %s59, %s61
      %p65 = scmp.eq.s32.totalorder %s13, 0
      %p66 = por %p64, %p65
      %p67 = scmp.ne.s32.totalorder %s59, %s61
      %p68 = scmp.eq.s32.totalorder %s18, 3
      %p69 = por %p67, %p68
      %p70 = scmp.ne.s32.totalorder %s61, %s62
      %p71 = scmp.eq.s32.totalorder %s18, 0
      %p72 = por %p70, %p71
      %p73 = scmp.ne.s32.totalorder %s61, %s62
      %p74 = scmp.eq.s32.totalorder %s19, 3
      %p75 = por %p73, %p74
      %p77 = scmp.ne.s32.totalorder %s62, %s76
      %p78 = scmp.eq.s32.totalorder %s19, 0
      %p79 = por %p77, %p78
      %s81 = sadd.s32 %s80, 1
      %p84 = scmp.eq.s32.totalorder %s13, 3
      %p85 = scmp.ne.s32.totalorder %s80, %s82
      %p86 = scmp.eq.s32.totalorder %s13, 0
      %p87 = por %p85, %p86
      %p88 = scmp.ne.s32.totalorder %s80, %s82
      %p89 = scmp.eq.s32.totalorder %s18, 3
      %p90 = por %p88, %p89
      %p91 = scmp.ne.s32.totalorder %s82, %s83
      %p92 = scmp.eq.s32.totalorder %s18, 0
      %p93 = por %p91, %p92
      %p94 = scmp.ne.s32.totalorder %s82, %s83
      %p95 = scmp.eq.s32.totalorder %s19, 3
      %p96 = por %p94, %p95
      %p98 = scmp.ne.s32.totalorder %s83, %s97
      %p99 = scmp.eq.s32.totalorder %s19, 0
      %p100 = por %p98, %p99
      %s101 = ssub.s32 %s21, %s28
      %p102 = scmp.eq.s32.totalorder %s101, 0
      %s104 = sadd.s32 %s103, 1
      %s105 = scalar_select %p102, %s103, %s104
      %p108 = pneg %p102
      %p109 = scmp.eq.s32.totalorder %s13, 3
      %p110 = por %p108, %p109
      %p111 = scmp.ne.s32.totalorder %s103, %s106
      %p112 = scmp.eq.s32.totalorder %s13, 0
      %p113 = por %p111, %p112
      %p114 = scmp.ne.s32.totalorder %s103, %s106
      %p115 = scmp.eq.s32.totalorder %s18, 3
      %p116 = por %p114, %p115
      %p117 = scmp.ne.s32.totalorder %s106, %s107
      %p118 = scmp.eq.s32.totalorder %s18, 0
      %p119 = por %p117, %p118
      %p120 = scmp.ne.s32.totalorder %s106, %s107
      %p121 = scmp.eq.s32.totalorder %s19, 3
      %p122 = por %p120, %p121
      %p124 = scmp.ne.s32.totalorder %s107, %s123
      %p125 = scmp.eq.s32.totalorder %s19, 0
      %p126 = por %p124, %p125
      %s127 = ssub.s32 %s20, %s32
      %s128 = ssub.s32 %s21, %s28
      %s129 = sor.u32 %s127, %s128
      %p130 = scmp.eq.s32.totalorder %s129, 0
      %s132 = sadd.s32 %s131, 1
      %s133 = scalar_select %p130, %s131, %s132
      %p136 = pneg %p130
      %p137 = scmp.eq.s32.totalorder %s13, 3
      %p138 = por %p136, %p137
      %p139 = scmp.ne.s32.totalorder %s131, %s134
      %p140 = scmp.eq.s32.totalorder %s13, 0
      %p141 = por %p139, %p140
      %p142 = scmp.ne.s32.totalorder %s131, %s134
      %p143 = scmp.eq.s32.totalorder %s18, 3
      %p144 = por %p142, %p143
      %p145 = scmp.ne.s32.totalorder %s134, %s135
      %p146 = scmp.eq.s32.totalorder %s18, 0
      %p147 = por %p145, %p146
      %p148 = scmp.ne.s32.totalorder %s134, %s135
      %p149 = scmp.eq.s32.totalorder %s19, 3
      %p150 = por %p148, %p149
      %p152 = scmp.ne.s32.totalorder %s135, %s151
      %p153 = scmp.eq.s32.totalorder %s19, 0
      %p154 = por %p152, %p153
      %p155 = scmp.le.s32.totalorder 1, %s13
      %p156 = scmp.lt.s32.totalorder %s13, 5
      %p157 = pnand %p155, %p156
      %p158 = pneg %p157
      // Predicated region
      $region9: #{_lambda_.3} parent=5 // pred_check
        _
      $region10: #{_lambda_.3} parent=5 // pred_check_branch
        %160 = sbr.rel (%p157) target = $region12
      $region11: #{_lambda_.3} parent=5 // pred_region
        %s161 = ssub.s32 %s13, 1
        // Predicated region
        $region13: #{_lambda_.3} parent=11 // pred_check
          %p162 = pneg %p72
        $region14: #{_lambda_.3} parent=11 // pred_check_branch
          %164 = sbr.rel (%p162) target = $region16
        $region15: #{_lambda_.3} parent=11 // pred_region
          _
        $region16: #{_lambda_.3} parent=11 // pred_fallthru
          _
        // Predicated region
        $region17: #{_lambda_.3} parent=11 // pred_check
          %p165 = pneg %p93
        $region18: #{_lambda_.3} parent=11 // pred_check_branch
          %167 = sbr.rel (%p165) target = $region20
        $region19: #{_lambda_.3} parent=11 // pred_region
          _
        $region20: #{_lambda_.3} parent=11 // pred_fallthru
          _
        // Predicated region
        $region21: #{_lambda_.3} parent=11 // pred_check
          %p168 = pneg %p119
        $region22: #{_lambda_.3} parent=11 // pred_check_branch
          %170 = sbr.rel (%p168) target = $region24
        $region23: #{_lambda_.3} parent=11 // pred_region
          %s171 = smul.u32 16, %s23
          %p172 = scmp.lt.s32.totalorder %s171, 15
          %s173 = scalar_select %p172, %s171, 15
          %s174 = smul.addr %s173, 4
          %s175 = scalar_lea.vmem %s3, %s174
          %s176 = smul.u32 16, %s23
        $region24: #{_lambda_.3} parent=11 // pred_fallthru
          _
      $region12: #{_lambda_.3} parent=5 // pred_fallthru
        _
      %p177 = scmp.lt.s32.totalorder %s13, 4
      // Predicated region
      $region25: #{_lambda_.3} parent=5 // pred_check
        %p178 = pneg %p177
      $region26: #{_lambda_.3} parent=5 // pred_check_branch
        %180 = sbr.rel (%p178) target = $region28
      $region27: #{_lambda_.3} parent=5 // pred_region
        // Predicated region
        $region29: #{_lambda_.3} parent=27 // pred_check
          %p181 = pneg %p45
        $region30: #{_lambda_.3} parent=27 // pred_check_branch
          %183 = sbr.rel (%p181) target = $region32
        $region31: #{_lambda_.3} parent=27 // pred_region
          %p184 = scmp.lt.s32.totalorder %s20, 3
          %s185 = scalar_select %p184, %s20, 3
          %s186 = smul.addr %s185, 4
          %s187 = scalar_lea.vmem %s0, %s186
        $region32: #{_lambda_.3} parent=27 // pred_fallthru
          _
      $region28: #{_lambda_.3} parent=5 // pred_fallthru
        _
      %p188 = scmp.le.s32.totalorder 1, %s13
      %p189 = scmp.lt.s32.totalorder %s13, 5
      %p190 = pnand %p188, %p189
      %p191 = pneg %p190
      // Predicated region
      $region33: #{_lambda_.3} parent=5 // pred_check
        _
      $region34: #{_lambda_.3} parent=5 // pred_check_branch
        %193 = sbr.rel (%p190) target = $region36
      $region35: #{_lambda_.3} parent=5 // pred_region
        %s194 = ssub.s32 %s13, 1
        %p195 = scmp.lt.s32.totalorder %s22, 3
        %s196 = scalar_select %p195, %s22, 3
        %s197 = smul.addr %s196, 4
        %s198 = scalar_lea.vmem %s0, %s197
        %p199 = pneg %p51
        %p200 = pneg %p48
        %p201 = pneg %p72
        %p202 = pneg %p69
        %p203 = pneg %p93
        %p204 = pneg %p90
        %s205 = smul.u32 16, %s23
        %p206 = scmp.lt.s32.totalorder %s205, 15
        %s207 = scalar_select %p206, %s205, 15
        %s208 = smul.addr %s207, 4
        %s209 = scalar_lea.vmem %s3, %s208
        %p210 = pneg %p119
        %p211 = pneg %p116
        %p212 = pneg %p147
        %p213 = pneg %p144
        %s214 = sand.u32 %s134, 1
        %s215 = scalar_lea.sflag [#allocation4], %s214
        %s216 = sand.u32 %s134, 1
        %s217 = smul.addr %s216, 8
        %s218 = scalar_lea.vmem [#allocation3], %s217
        %p219 = scmp.lt.s32.totalorder %s22, 3
        %s220 = scalar_select %p219, %s22, 3
        %s221 = smul.addr %s220, 4
        %s222 = scalar_lea.vmem %s0, %s221
        %s223 = smul.u32 16, %s23
        %p224 = scmp.lt.s32.totalorder %s223, 15
        %s225 = scalar_select %p224, %s223, 15
        %s226 = smul.addr %s225, 4
        %s227 = scalar_lea.vmem %s3, %s226
        %s228 = smul.u32 16, %s23
        %p230 = scmp.eq.s32.totalorder %s23, 0
        // Predicated region
        $region37: #{_lambda_.3} parent=35 // pred_check
          %p231 = pneg %p230
        $region38: #{_lambda_.3} parent=35 // pred_check_branch
          %233 = sbr.rel (%p231) target = $region40
        $region39: #{_lambda_.3} parent=35 // pred_region
          %v234 = vld [vmem:[%s222] sm:$0xf]
          %v235 = vunpack.c.l.bf16 %v234
          %v236 = vld [vmem:[%s1] sm:$0x1]
          %v237 = vld [vmem:[%s2] sm:$0x1]
          %vm238 = vcmask 261120
          %v239 = vsel %vm238, %v235, 0.0
          %240 = vadd.xlane.f32.xlu0 %v239
          %v241 = vpop.xlane.xlu0 %240
          %v242 = vrcp.pop 32.0
          %v243 = vmul.f32 %v241, %v242
          %v244 = vsub.f32 %v235, %v243
          %v245 = vmul.f32 %v244, %v244
          %v246 = vsel %vm238, %v245, 0.0
          %247 = vadd.xlane.f32.xlu0 %v246
          %v248 = vpop.xlane.xlu0 %247
          %v249 = vmul.f32 %v248, %v242
          %v250 = vadd.f32 %v249, 1e-05
          %v251 = vrsqrt.pop %v250
          %v252 = vmul.f32 %v244, %v251
          %v254 = vlaneseq
          %v255 = vshrl.u32 %v254, 7
          %v256 = vsub.s32 0, %v255
          %v257 = vrot.slane %v236, %v256
          %v259 = vmul.f32 %v252, %v257
          %v261 = vlaneseq
          %v262 = vshrl.u32 %v261, 7
          %v263 = vsub.s32 0, %v262
          %v264 = vrot.slane %v237, %v263
          %v266 = vadd.f32 %v259, %v264
          %v267 = vpack.c.bf16 %v266, %v266
          %vm268 = vcmask 257024
          %269 = vst.msk [vmem:[#allocation2] sm:$0xf] %vm268, %v267
        $region40: #{_lambda_.3} parent=35 // pred_fallthru
          _
        %v270 = vld [vmem:[#allocation2] sm:$0xf]
        %v271 = vld [vmem:[%s227] sm:$0xf]
        %v272 = vld [vmem:[%s227 + $0x4] sm:$0xf]
        %v273 = vld [vmem:[%s227 + $0x8] sm:$0xf]
        %v274 = vld [vmem:[%s227 + $0xc] sm:$0xf]
        %v275 = vld [vmem:[%s227 + $0x10] sm:$0xf]
        %v276 = vld [vmem:[%s227 + $0x14] sm:$0xf]
        %v277 = vld [vmem:[%s227 + $0x18] sm:$0xf]
        %v278 = vld [vmem:[%s227 + $0x1c] sm:$0xf]
        %v279 = vld [vmem:[%s227 + $0x20] sm:$0xf]
        %v280 = vld [vmem:[%s227 + $0x24] sm:$0xf]
        %v281 = vld [vmem:[%s227 + $0x28] sm:$0xf]
        %v282 = vld [vmem:[%s227 + $0x2c] sm:$0xf]
        %v283 = vld [vmem:[%s227 + $0x30] sm:$0xf]
        %v284 = vld [vmem:[%s227 + $0x34] sm:$0xf]
        %v285 = vld [vmem:[%s227 + $0x38] sm:$0xf]
        %v286 = vld [vmem:[%s227 + $0x3c] sm:$0xf]
        %v303 = vunpack.c.l.b16 %v271
        %v304 = vunpack.c.l.b16 %v272
        %v305 = vunpack.c.l.b16 %v273
        %v306 = vunpack.c.l.b16 %v274
        %v307 = vunpack.c.l.b16 %v275
        %v308 = vunpack.c.l.b16 %v276
        %v309 = vunpack.c.l.b16 %v277
        %v310 = vunpack.c.l.b16 %v278
        %v311 = vunpack.c.l.b16 %v279
        %v312 = vunpack.c.l.b16 %v280
        %v313 = vunpack.c.l.b16 %v281
        %v314 = vunpack.c.l.b16 %v282
        %v315 = vunpack.c.l.b16 %v283
        %v316 = vunpack.c.l.b16 %v284
        %v317 = vunpack.c.l.b16 %v285
        %v318 = vunpack.c.l.b16 %v286
        %v319 = vpack.c.b16 %v304, %v303
        %v320 = vpack.c.b16 %v306, %v305
        %v321 = vpack.c.b16 %v308, %v307
        %v322 = vpack.c.b16 %v310, %v309
        %v323 = vpack.c.b16 %v312, %v311
        %v324 = vpack.c.b16 %v314, %v313
        %v325 = vpack.c.b16 %v316, %v315
        %v326 = vpack.c.b16 %v318, %v317
        %vm327 = vcmask 261120
        %v329 = vsel %vm327, %v270, 0
        %v332 = vsel %vm327, %v319, 0
        %v335 = vsel %vm327, %v320, 0
        %v338 = vsel %vm327, %v321, 0
        %v341 = vsel %vm327, %v322, 0
        %v344 = vsel %vm327, %v323, 0
        %v347 = vsel %vm327, %v324, 0
        %v350 = vsel %vm327, %v325, 0
        %v353 = vsel %vm327, %v326, 0
        %355 = vmatprep.subr.bf16.mxu0 0
        %356 = vmatpush1.bf16.xpose.msra.mxu0 %v353
        %357 = vmatprep.subr.bf16.mxu0 0
        %358 = vmatpush1.bf16.xpose.msra.mxu0 %v350
        %359 = vmatprep.subr.bf16.mxu0 0
        %360 = vmatpush1.bf16.xpose.msra.mxu0 %v347
        %361 = vmatprep.subr.bf16.mxu0 0
        %362 = vmatpush1.bf16.xpose.msra.mxu0 %v344
        %363 = vmatprep.subr.bf16.mxu0 0
        %364 = vmatpush1.bf16.xpose.msra.mxu0 %v341
        %365 = vmatprep.subr.bf16.mxu0 0
        %366 = vmatpush1.bf16.xpose.msra.mxu0 %v338
        %367 = vmatprep.subr.bf16.mxu0 0
        %368 = vmatpush1.bf16.xpose.msra.mxu0 %v335
        %369 = vmatprep.subr.bf16.mxu0 0
        %370 = vmatpush1.bf16.xpose.msra.mxu0 %v332
        %371 = vmatprep.subr.bf16.mxu0 0
        %372 = vmatpush2.bf16.xpose.msra.mxu0 0
        %373 = vmatprep.subr.bf16.mxu0 0
        %374 = vmatpush2.bf16.xpose.msra.mxu0 0
        %375 = vmatprep.subr.bf16.mxu0 0
        %376 = vmatpush2.bf16.xpose.msra.mxu0 0
        %377 = vmatprep.subr.bf16.mxu0 0
        %378 = vmatpush2.bf16.xpose.msra.mxu0 0
        %379 = vmatprep.subr.bf16.mxu0 0
        %380 = vmatpush2.bf16.xpose.msra.mxu0 0
        %381 = vmatprep.subr.bf16.mxu0 0
        %382 = vmatpush2.bf16.xpose.msra.mxu0 0
        %383 = vmatprep.subr.bf16.mxu0 0
        %384 = vmatpush2.bf16.xpose.msra.mxu0 0
        %385 = vmatprep.subr.bf16.mxu0 0
        %386 = vmatpush2.bf16.xpose.msra.mxu0 0
        %387 = vmatprep.mubr.bf16.mxu0 0
        %388 = vmatmul.mubr.bf16.gmra.mxu0 %v329
        %v389 = vpop.f32.mrf.mxu0
        %v390 = vadd.f32 0.0, %v389
        %v391 = vpop.f32.mrf.mxu0
        %v392 = vpop.f32.mrf.mxu0
        %v393 = vpop.f32.mrf.mxu0
        %394 = vdwg.mxu0
        %395 = vst [vmem:[%s218] sm:$0xff] %v390
        %s396 = sand.u32 %s134, 1
        %s397 = scalar_lea.sflag [#allocation4], %s396
        %s398 = sand.u32 %s134, 1
        %s399 = smul.addr %s398, 8
        %s400 = scalar_lea.vmem [#allocation3], %s399
        // Predicated region
        $region41: #{_lambda_.3} parent=35 // pred_check
          %p401 = pneg %p144
        $region42: #{_lambda_.3} parent=35 // pred_check_branch
          %403 = sbr.rel (%p401) target = $region44
        $region43: #{_lambda_.3} parent=35 // pred_region
          %s405 = ssub.s32 128, 128
          %406 = vsyncadd %s397, %s405
          %s407 = sadd.s32 %s23, %s22
          %s408 = smul.addr %s407, 128
          %s409 = scalar_lea.hbm %s4, %s408
          %s411 = sshll.u32 %s400, 4
          %s412 = int_to_ptr.vmem [resolvable:$true] %s411
          %414 = dma.vmem_to_hbm [thread:$0]  %s412, 128, %s409, %s397
        $region44: #{_lambda_.3} parent=35 // pred_fallthru
          _
      $region36: #{_lambda_.3} parent=5 // pred_fallthru
        _
      %p415 = scmp.le.s32.totalorder 2, %s13
      // Predicated region
      $region45: #{_lambda_.3} parent=5 // pred_check
        %p416 = pneg %p415
      $region46: #{_lambda_.3} parent=5 // pred_check_branch
        %418 = sbr.rel (%p416) target = $region48
      $region47: #{_lambda_.3} parent=5 // pred_region
        %s419 = ssub.s32 %s13, 2
        // Predicated region
        $region49: #{_lambda_.3} parent=47 // pred_check
          %p420 = pneg %p150
        $region50: #{_lambda_.3} parent=47 // pred_check_branch
          %422 = sbr.rel (%p420) target = $region52
        $region51: #{_lambda_.3} parent=47 // pred_region
          %s423 = sand.u32 %s135, 1
          %s424 = scalar_lea.sflag [#allocation4], %s423
          %s425 = sand.u32 %s135, 1
          %s426 = smul.addr %s425, 8
          %s427 = scalar_lea.vmem [#allocation3], %s426
          %428 = dma.done %s424, 128
        $region52: #{_lambda_.3} parent=47 // pred_fallthru
          _
      $region48: #{_lambda_.3} parent=5 // pred_fallthru
        _
    $region6: #{_lambda_.3} parent=1 // loop_footer
      %s17 = sadd.s32 1, %s13
    $region7: #{_lambda_.3} parent=1 // loop_footer_branch
      %12 = sbr.rel target = $region3
    $region8: #{_lambda_.3} parent=1 // loop_exit
      _
    %429 = vsyncpa [#allocation4], 1
    %s430 = scalar_lea.sflag [#allocation4], 1
    %431 = vsyncpa %s430, 1

// kernel: _lambda_.2
$region0: #{_lambda_.2}
  #allocation0 [shape = 'u32[]', space=smem, size = 0x4, offset = 0x4, fixed_abs, tag = 'smem constant byte address 0x4 - core index']
  #allocation1 [shape = 'u32[144,128]{1,0:T(1,128)}', space=vmem, size = 0x12000, scoped, tag = 'internal scratch']
  #allocation2 [shape = 'f32[8,32]{1,0:T(8,128)}', space=vmem, size = 0x1000, scoped, tag = 'scratch operand']
  %s0 = inlined_call_operand.vmem [shape: bf16[4,8,32], index: 0, kind: input, shape index: {}]
  %s1 = inlined_call_operand.vmem [shape: f32[2,1,32], index: 1, kind: input, shape index: {}]
  %s2 = inlined_call_operand.vmem [shape: f32[2,1,32], index: 2, kind: input, shape index: {}]
  %s3 = inlined_call_operand.vmem [shape: bf16[2,32,96], index: 3, kind: input, shape index: {}]
  %s4 = inlined_call_operand.vmem [shape: f32[2,1,96], index: 4, kind: input, shape index: {}]
  %s5 = inlined_call_operand.vmem [shape: bf16[2,32,32], index: 5, kind: input, shape index: {}]
  %s6 = inlined_call_operand.vmem [shape: f32[2,1,32], index: 6, kind: input, shape index: {}]
  %s7 = inlined_call_operand.vmem [shape: f32[2,1,32], index: 7, kind: input, shape index: {}]
  %s8 = inlined_call_operand.vmem [shape: f32[2,1,32], index: 8, kind: input, shape index: {}]
  %s9 = inlined_call_operand.vmem [shape: bf16[2,32,64], index: 9, kind: input, shape index: {}]
  %s10 = inlined_call_operand.vmem [shape: f32[2,1,64], index: 10, kind: input, shape index: {}]
  %s11 = inlined_call_operand.vmem [shape: bf16[2,64,32], index: 11, kind: input, shape index: {}]
  %s12 = inlined_call_operand.vmem [shape: f32[2,1,32], index: 12, kind: input, shape index: {}]
  %s13 = inlined_call_operand.vmem [shape: bf16[4,8,32], index: 13, kind: output, shape index: {}]
  %s14 = sld [smem:[#allocation0]]
  $region93: #{_lambda_.2} parent=0
    _
  %s16 = ssub.s32 1, %s14
  %s17 = scalar_select 0, %s16, %s14
  loop: start=0, step=1, limit=10
  $region2: #{_lambda_.2} parent=0 // loop_pre_header
    _
  $region3: #{_lambda_.2} parent=0 // loop_header
    %s19 = sphi 0, %s23
    %p20 = scmp.ge.s32.totalorder %s19, 10
    %s26 = sphi 0, %s38
    %s27 = sphi 0, %s34
    %s28 = sphi 0, %s26
    %s29 = sphi 0, %s27
    %s30 = sphi 0, %s28
    %s31 = sphi 0, %s29
    %s41 = sphi 0, %s43
    %s44 = sphi 0, %s41
    %s45 = sphi 0, %s44
    %s61 = sphi 0, %s45
    %s67 = sphi 0, %s69
    %s70 = sphi 0, %s67
    %s71 = sphi 0, %s70
    %s87 = sphi 0, %s71
    %s93 = sphi 0, %s95
    %s96 = sphi 0, %s93
    %s97 = sphi 0, %s96
    %s113 = sphi 0, %s97
    %s119 = sphi 0, %s121
    %s122 = sphi 0, %s119
    %s123 = sphi 0, %s122
    %s139 = sphi 0, %s123
    %s145 = sphi 0, %s147
    %s148 = sphi 0, %s145
    %s149 = sphi 0, %s148
    %s165 = sphi 0, %s149
    %s171 = sphi 0, %s173
    %s174 = sphi 0, %s171
    %s175 = sphi 0, %s174
    %s191 = sphi 0, %s175
    %s197 = sphi 0, %s199
    %s200 = sphi 0, %s197
    %s201 = sphi 0, %s200
    %s217 = sphi 0, %s201
    %s223 = sphi 0, %s225
    %s226 = sphi 0, %s223
    %s227 = sphi 0, %s226
    %s243 = sphi 0, %s227
    %s249 = sphi 0, %s251
    %s252 = sphi 0, %s249
    %s253 = sphi 0, %s252
    %s269 = sphi 0, %s253
    %s275 = sphi 0, %s277
    %s278 = sphi 0, %s275
    %s279 = sphi 0, %s278
    %s295 = sphi 0, %s279
    %s301 = sphi 0, %s303
    %s304 = sphi 0, %s301
    %s305 = sphi 0, %s304
    %s321 = sphi 0, %s305
    %s327 = sphi 0, %s329
    %s330 = sphi 0, %s327
    %s331 = sphi 0, %s330
    %s347 = sphi 0, %s331
    %s353 = sphi 0, %s355
    %s356 = sphi 0, %s353
    %s357 = sphi 0, %s356
    %s373 = sphi 0, %s357
    %s379 = sphi 0, %s381
    %s382 = sphi 0, %s379
    %s383 = sphi 0, %s382
    %s399 = sphi 0, %s383
  $region4: #{_lambda_.2} parent=0 // loop_header_branch
    %22 = sbr.rel (%p20) target = $region8
  $region5: #{_lambda_.2} parent=0 // loop_body
    %s24 = ssub.s32 %s19, 1
    %s25 = ssub.s32 %s19, 2
    %s32 = sadd.s32 1, %s27
    %p33 = scmp.ge.s32.totalorder %s32, 2
    %s34 = scalar_select %p33, 0, %s32
    %s35 = sadd.s32 1, %s26
    %s36 = scalar_select %p33, %s35, %s26
    %p37 = scmp.ge.s32.totalorder %s36, 4
    %s38 = scalar_select %p37, 0, %s36
    %s39 = ssub.s32 %s26, %s38
    %p40 = scmp.eq.s32.totalorder %s39, 0
    %s42 = sadd.s32 %s41, 1
    %s43 = scalar_select %p40, %s41, %s42
    %p46 = pneg %p40
    %p47 = scmp.eq.s32.totalorder %s19, 7
    %p48 = por %p46, %p47
    %p49 = scmp.ne.s32.totalorder %s41, %s44
    %p50 = scmp.eq.s32.totalorder %s19, 0
    %p51 = por %p49, %p50
    %p52 = scmp.ne.s32.totalorder %s41, %s44
    %p53 = scmp.eq.s32.totalorder %s24, 7
    %p54 = por %p52, %p53
    %p55 = scmp.ne.s32.totalorder %s44, %s45
    %p56 = scmp.eq.s32.totalorder %s24, 0
    %p57 = por %p55, %p56
    %p58 = scmp.ne.s32.totalorder %s44, %s45
    %p59 = scmp.eq.s32.totalorder %s25, 7
    %p60 = por %p58, %p59
    %p62 = scmp.ne.s32.totalorder %s45, %s61
    %p63 = scmp.eq.s32.totalorder %s25, 0
    %p64 = por %p62, %p63
    %s65 = ssub.s32 %s27, %s34
    %p66 = scmp.eq.s32.totalorder %s65, 0
    %s68 = sadd.s32 %s67, 1
    %s69 = scalar_select %p66, %s67, %s68
    %p72 = pneg %p66
    %p73 = scmp.eq.s32.totalorder %s19, 7
    %p74 = por %p72, %p73
    %p75 = scmp.ne.s32.totalorder %s67, %s70
    %p76 = scmp.eq.s32.totalorder %s19, 0
    %p77 = por %p75, %p76
    %p78 = scmp.ne.s32.totalorder %s67, %s70
    %p79 = scmp.eq.s32.totalorder %s24, 7
    %p80 = por %p78, %p79
    %p81 = scmp.ne.s32.totalorder %s70, %s71
    %p82 = scmp.eq.s32.totalorder %s24, 0
    %p83 = por %p81, %p82
    %p84 = scmp.ne.s32.totalorder %s70, %s71
    %p85 = scmp.eq.s32.totalorder %s25, 7
    %p86 = por %p84, %p85
    %p88 = scmp.ne.s32.totalorder %s71, %s87
    %p89 = scmp.eq.s32.totalorder %s25, 0
    %p90 = por %p88, %p89
    %s91 = ssub.s32 %s27, %s34
    %p92 = scmp.eq.s32.totalorder %s91, 0
    %s94 = sadd.s32 %s93, 1
    %s95 = scalar_select %p92, %s93, %s94
    %p98 = pneg %p92
    %p99 = scmp.eq.s32.totalorder %s19, 7
    %p100 = por %p98, %p99
    %p101 = scmp.ne.s32.totalorder %s93, %s96
    %p102 = scmp.eq.s32.totalorder %s19, 0
    %p103 = por %p101, %p102
    %p104 = scmp.ne.s32.totalorder %s93, %s96
    %p105 = scmp.eq.s32.totalorder %s24, 7
    %p106 = por %p104, %p105
    %p107 = scmp.ne.s32.totalorder %s96, %s97
    %p108 = scmp.eq.s32.totalorder %s24, 0
    %p109 = por %p107, %p108
    %p110 = scmp.ne.s32.totalorder %s96, %s97
    %p111 = scmp.eq.s32.totalorder %s25, 7
    %p112 = por %p110, %p111
    %p114 = scmp.ne.s32.totalorder %s97, %s113
    %p115 = scmp.eq.s32.totalorder %s25, 0
    %p116 = por %p114, %p115
    %s117 = ssub.s32 %s27, %s34
    %p118 = scmp.eq.s32.totalorder %s117, 0
    %s120 = sadd.s32 %s119, 1
    %s121 = scalar_select %p118, %s119, %s120
    %p124 = pneg %p118
    %p125 = scmp.eq.s32.totalorder %s19, 7
    %p126 = por %p124, %p125
    %p127 = scmp.ne.s32.totalorder %s119, %s122
    %p128 = scmp.eq.s32.totalorder %s19, 0
    %p129 = por %p127, %p128
    %p130 = scmp.ne.s32.totalorder %s119, %s122
    %p131 = scmp.eq.s32.totalorder %s24, 7
    %p132 = por %p130, %p131
    %p133 = scmp.ne.s32.totalorder %s122, %s123
    %p134 = scmp.eq.s32.totalorder %s24, 0
    %p135 = por %p133, %p134
    %p136 = scmp.ne.s32.totalorder %s122, %s123
    %p137 = scmp.eq.s32.totalorder %s25, 7
    %p138 = por %p136, %p137
    %p140 = scmp.ne.s32.totalorder %s123, %s139
    %p141 = scmp.eq.s32.totalorder %s25, 0
    %p142 = por %p140, %p141
    %s143 = ssub.s32 %s27, %s34
    %p144 = scmp.eq.s32.totalorder %s143, 0
    %s146 = sadd.s32 %s145, 1
    %s147 = scalar_select %p144, %s145, %s146
    %p150 = pneg %p144
    %p151 = scmp.eq.s32.totalorder %s19, 7
    %p152 = por %p150, %p151
    %p153 = scmp.ne.s32.totalorder %s145, %s148
    %p154 = scmp.eq.s32.totalorder %s19, 0
    %p155 = por %p153, %p154
    %p156 = scmp.ne.s32.totalorder %s145, %s148
    %p157 = scmp.eq.s32.totalorder %s24, 7
    %p158 = por %p156, %p157
    %p159 = scmp.ne.s32.totalorder %s148, %s149
    %p160 = scmp.eq.s32.totalorder %s24, 0
    %p161 = por %p159, %p160
    %p162 = scmp.ne.s32.totalorder %s148, %s149
    %p163 = scmp.eq.s32.totalorder %s25, 7
    %p164 = por %p162, %p163
    %p166 = scmp.ne.s32.totalorder %s149, %s165
    %p167 = scmp.eq.s32.totalorder %s25, 0
    %p168 = por %p166, %p167
    %s169 = ssub.s32 %s27, %s34
    %p170 = scmp.eq.s32.totalorder %s169, 0
    %s172 = sadd.s32 %s171, 1
    %s173 = scalar_select %p170, %s171, %s172
    %p176 = pneg %p170
    %p177 = scmp.eq.s32.totalorder %s19, 7
    %p178 = por %p176, %p177
    %p179 = scmp.ne.s32.totalorder %s171, %s174
    %p180 = scmp.eq.s32.totalorder %s19, 0
    %p181 = por %p179, %p180
    %p182 = scmp.ne.s32.totalorder %s171, %s174
    %p183 = scmp.eq.s32.totalorder %s24, 7
    %p184 = por %p182, %p183
    %p185 = scmp.ne.s32.totalorder %s174, %s175
    %p186 = scmp.eq.s32.totalorder %s24, 0
    %p187 = por %p185, %p186
    %p188 = scmp.ne.s32.totalorder %s174, %s175
    %p189 = scmp.eq.s32.totalorder %s25, 7
    %p190 = por %p188, %p189
    %p192 = scmp.ne.s32.totalorder %s175, %s191
    %p193 = scmp.eq.s32.totalorder %s25, 0
    %p194 = por %p192, %p193
    %s195 = ssub.s32 %s27, %s34
    %p196 = scmp.eq.s32.totalorder %s195, 0
    %s198 = sadd.s32 %s197, 1
    %s199 = scalar_select %p196, %s197, %s198
    %p202 = pneg %p196
    %p203 = scmp.eq.s32.totalorder %s19, 7
    %p204 = por %p202, %p203
    %p205 = scmp.ne.s32.totalorder %s197, %s200
    %p206 = scmp.eq.s32.totalorder %s19, 0
    %p207 = por %p205, %p206
    %p208 = scmp.ne.s32.totalorder %s197, %s200
    %p209 = scmp.eq.s32.totalorder %s24, 7
    %p210 = por %p208, %p209
    %p211 = scmp.ne.s32.totalorder %s200, %s201
    %p212 = scmp.eq.s32.totalorder %s24, 0
    %p213 = por %p211, %p212
    %p214 = scmp.ne.s32.totalorder %s200, %s201
    %p215 = scmp.eq.s32.totalorder %s25, 7
    %p216 = por %p214, %p215
    %p218 = scmp.ne.s32.totalorder %s201, %s217
    %p219 = scmp.eq.s32.totalorder %s25, 0
    %p220 = por %p218, %p219
    %s221 = ssub.s32 %s27, %s34
    %p222 = scmp.eq.s32.totalorder %s221, 0
    %s224 = sadd.s32 %s223, 1
    %s225 = scalar_select %p222, %s223, %s224
    %p228 = pneg %p222
    %p229 = scmp.eq.s32.totalorder %s19, 7
    %p230 = por %p228, %p229
    %p231 = scmp.ne.s32.totalorder %s223, %s226
    %p232 = scmp.eq.s32.totalorder %s19, 0
    %p233 = por %p231, %p232
    %p234 = scmp.ne.s32.totalorder %s223, %s226
    %p235 = scmp.eq.s32.totalorder %s24, 7
    %p236 = por %p234, %p235
    %p237 = scmp.ne.s32.totalorder %s226, %s227
    %p238 = scmp.eq.s32.totalorder %s24, 0
    %p239 = por %p237, %p238
    %p240 = scmp.ne.s32.totalorder %s226, %s227
    %p241 = scmp.eq.s32.totalorder %s25, 7
    %p242 = por %p240, %p241
    %p244 = scmp.ne.s32.totalorder %s227, %s243
    %p245 = scmp.eq.s32.totalorder %s25, 0
    %p246 = por %p244, %p245
    %s247 = ssub.s32 %s27, %s34
    %p248 = scmp.eq.s32.totalorder %s247, 0
    %s250 = sadd.s32 %s249, 1
    %s251 = scalar_select %p248, %s249, %s250
    %p254 = pneg %p248
    %p255 = scmp.eq.s32.totalorder %s19, 7
    %p256 = por %p254, %p255
    %p257 = scmp.ne.s32.totalorder %s249, %s252
    %p258 = scmp.eq.s32.totalorder %s19, 0
    %p259 = por %p257, %p258
    %p260 = scmp.ne.s32.totalorder %s249, %s252
    %p261 = scmp.eq.s32.totalorder %s24, 7
    %p262 = por %p260, %p261
    %p263 = scmp.ne.s32.totalorder %s252, %s253
    %p264 = scmp.eq.s32.totalorder %s24, 0
    %p265 = por %p263, %p264
    %p266 = scmp.ne.s32.totalorder %s252, %s253
    %p267 = scmp.eq.s32.totalorder %s25, 7
    %p268 = por %p266, %p267
    %p270 = scmp.ne.s32.totalorder %s253, %s269
    %p271 = scmp.eq.s32.totalorder %s25, 0
    %p272 = por %p270, %p271
    %s273 = ssub.s32 %s27, %s34
    %p274 = scmp.eq.s32.totalorder %s273, 0
    %s276 = sadd.s32 %s275, 1
    %s277 = scalar_select %p274, %s275, %s276
    %p280 = pneg %p274
    %p281 = scmp.eq.s32.totalorder %s19, 7
    %p282 = por %p280, %p281
    %p283 = scmp.ne.s32.totalorder %s275, %s278
    %p284 = scmp.eq.s32.totalorder %s19, 0
    %p285 = por %p283, %p284
    %p286 = scmp.ne.s32.totalorder %s275, %s278
    %p287 = scmp.eq.s32.totalorder %s24, 7
    %p288 = por %p286, %p287
    %p289 = scmp.ne.s32.totalorder %s278, %s279
    %p290 = scmp.eq.s32.totalorder %s24, 0
    %p291 = por %p289, %p290
    %p292 = scmp.ne.s32.totalorder %s278, %s279
    %p293 = scmp.eq.s32.totalorder %s25, 7
    %p294 = por %p292, %p293
    %p296 = scmp.ne.s32.totalorder %s279, %s295
    %p297 = scmp.eq.s32.totalorder %s25, 0
    %p298 = por %p296, %p297
    %s299 = ssub.s32 %s27, %s34
    %p300 = scmp.eq.s32.totalorder %s299, 0
    %s302 = sadd.s32 %s301, 1
    %s303 = scalar_select %p300, %s301, %s302
    %p306 = pneg %p300
    %p307 = scmp.eq.s32.totalorder %s19, 7
    %p308 = por %p306, %p307
    %p309 = scmp.ne.s32.totalorder %s301, %s304
    %p310 = scmp.eq.s32.totalorder %s19, 0
    %p311 = por %p309, %p310
    %p312 = scmp.ne.s32.totalorder %s301, %s304
    %p313 = scmp.eq.s32.totalorder %s24, 7
    %p314 = por %p312, %p313
    %p315 = scmp.ne.s32.totalorder %s304, %s305
    %p316 = scmp.eq.s32.totalorder %s24, 0
    %p317 = por %p315, %p316
    %p318 = scmp.ne.s32.totalorder %s304, %s305
    %p319 = scmp.eq.s32.totalorder %s25, 7
    %p320 = por %p318, %p319
    %p322 = scmp.ne.s32.totalorder %s305, %s321
    %p323 = scmp.eq.s32.totalorder %s25, 0
    %p324 = por %p322, %p323
    %s325 = ssub.s32 %s27, %s34
    %p326 = scmp.eq.s32.totalorder %s325, 0
    %s328 = sadd.s32 %s327, 1
    %s329 = scalar_select %p326, %s327, %s328
    %p332 = pneg %p326
    %p333 = scmp.eq.s32.totalorder %s19, 7
    %p334 = por %p332, %p333
    %p335 = scmp.ne.s32.totalorder %s327, %s330
    %p336 = scmp.eq.s32.totalorder %s19, 0
    %p337 = por %p335, %p336
    %p338 = scmp.ne.s32.totalorder %s327, %s330
    %p339 = scmp.eq.s32.totalorder %s24, 7
    %p340 = por %p338, %p339
    %p341 = scmp.ne.s32.totalorder %s330, %s331
    %p342 = scmp.eq.s32.totalorder %s24, 0
    %p343 = por %p341, %p342
    %p344 = scmp.ne.s32.totalorder %s330, %s331
    %p345 = scmp.eq.s32.totalorder %s25, 7
    %p346 = por %p344, %p345
    %p348 = scmp.ne.s32.totalorder %s331, %s347
    %p349 = scmp.eq.s32.totalorder %s25, 0
    %p350 = por %p348, %p349
    %s351 = ssub.s32 %s27, %s34
    %p352 = scmp.eq.s32.totalorder %s351, 0
    %s354 = sadd.s32 %s353, 1
    %s355 = scalar_select %p352, %s353, %s354
    %p358 = pneg %p352
    %p359 = scmp.eq.s32.totalorder %s19, 7
    %p360 = por %p358, %p359
    %p361 = scmp.ne.s32.totalorder %s353, %s356
    %p362 = scmp.eq.s32.totalorder %s19, 0
    %p363 = por %p361, %p362
    %p364 = scmp.ne.s32.totalorder %s353, %s356
    %p365 = scmp.eq.s32.totalorder %s24, 7
    %p366 = por %p364, %p365
    %p367 = scmp.ne.s32.totalorder %s356, %s357
    %p368 = scmp.eq.s32.totalorder %s24, 0
    %p369 = por %p367, %p368
    %p370 = scmp.ne.s32.totalorder %s356, %s357
    %p371 = scmp.eq.s32.totalorder %s25, 7
    %p372 = por %p370, %p371
    %p374 = scmp.ne.s32.totalorder %s357, %s373
    %p375 = scmp.eq.s32.totalorder %s25, 0
    %p376 = por %p374, %p375
    %s377 = ssub.s32 %s26, %s38
    %p378 = scmp.eq.s32.totalorder %s377, 0
    %s380 = sadd.s32 %s379, 1
    %s381 = scalar_select %p378, %s379, %s380
    %p384 = pneg %p378
    %p385 = scmp.eq.s32.totalorder %s19, 7
    %p386 = por %p384, %p385
    %p387 = scmp.ne.s32.totalorder %s379, %s382
    %p388 = scmp.eq.s32.totalorder %s19, 0
    %p389 = por %p387, %p388
    %p390 = scmp.ne.s32.totalorder %s379, %s382
    %p391 = scmp.eq.s32.totalorder %s24, 7
    %p392 = por %p390, %p391
    %p393 = scmp.ne.s32.totalorder %s382, %s383
    %p394 = scmp.eq.s32.totalorder %s24, 0
    %p395 = por %p393, %p394
    %p396 = scmp.ne.s32.totalorder %s382, %s383
    %p397 = scmp.eq.s32.totalorder %s25, 7
    %p398 = por %p396, %p397
    %p400 = scmp.ne.s32.totalorder %s383, %s399
    %p401 = scmp.eq.s32.totalorder %s25, 0
    %p402 = por %p400, %p401
    %p403 = scmp.le.s32.totalorder 1, %s19
    %p404 = scmp.lt.s32.totalorder %s19, 9
    %p405 = pnand %p403, %p404
    %p406 = pneg %p405
    // Predicated region
    $region9: #{_lambda_.2} parent=5 // pred_check
      _
    $region10: #{_lambda_.2} parent=5 // pred_check_branch
      %408 = sbr.rel (%p405) target = $region12
    $region11: #{_lambda_.2} parent=5 // pred_region
      %s409 = ssub.s32 %s19, 1
    $region12: #{_lambda_.2} parent=5 // pred_fallthru
      _
    %p410 = scmp.lt.s32.totalorder %s19, 8
    // Predicated region
    $region13: #{_lambda_.2} parent=5 // pred_check
      %p411 = pneg %p410
    $region14: #{_lambda_.2} parent=5 // pred_check_branch
      %413 = sbr.rel (%p411) target = $region16
    $region15: #{_lambda_.2} parent=5 // pred_region
      // Predicated region
      $region17: #{_lambda_.2} parent=15 // pred_check
        %p414 = pneg %p51
      $region18: #{_lambda_.2} parent=15 // pred_check_branch
        %416 = sbr.rel (%p414) target = $region20
      $region19: #{_lambda_.2} parent=15 // pred_region
        %p417 = scmp.lt.s32.totalorder %s26, 3
        %s418 = scalar_select %p417, %s26, 3
        %s419 = smul.addr %s418, 4
        %s420 = scalar_lea.vmem %s0, %s419
      $region20: #{_lambda_.2} parent=15 // pred_fallthru
        _
      // Predicated region
      $region21: #{_lambda_.2} parent=15 // pred_check
        %p421 = pneg %p77
      $region22: #{_lambda_.2} parent=15 // pred_check_branch
        %423 = sbr.rel (%p421) target = $region24
      $region23: #{_lambda_.2} parent=15 // pred_region
        %p424 = scmp.lt.s32.totalorder %s27, 1
        %s425 = scalar_select %p424, %s27, 1
        %s426 = scalar_lea.vmem %s1, %s425
      $region24: #{_lambda_.2} parent=15 // pred_fallthru
        _
      // Predicated region
      $region25: #{_lambda_.2} parent=15 // pred_check
        %p427 = pneg %p103
      $region26: #{_lambda_.2} parent=15 // pred_check_branch
        %429 = sbr.rel (%p427) target = $region28
      $region27: #{_lambda_.2} parent=15 // pred_region
        %p430 = scmp.lt.s32.totalorder %s27, 1
        %s431 = scalar_select %p430, %s27, 1
        %s432 = scalar_lea.vmem %s2, %s431
      $region28: #{_lambda_.2} parent=15 // pred_fallthru
        _
      // Predicated region
      $region29: #{_lambda_.2} parent=15 // pred_check
        %p433 = pneg %p129
      $region30: #{_lambda_.2} parent=15 // pred_check_branch
        %435 = sbr.rel (%p433) target = $region32
      $region31: #{_lambda_.2} parent=15 // pred_region
        %p436 = scmp.lt.s32.totalorder %s27, 1
        %s437 = scalar_select %p436, %s27, 1
        %s438 = smul.addr %s437, 4
        %s439 = smul.addr %s438, 4
        %s440 = scalar_lea.vmem %s3, %s439
      $region32: #{_lambda_.2} parent=15 // pred_fallthru
        _
      // Predicated region
      $region33: #{_lambda_.2} parent=15 // pred_check
        %p441 = pneg %p155
      $region34: #{_lambda_.2} parent=15 // pred_check_branch
        %443 = sbr.rel (%p441) target = $region36
      $region35: #{_lambda_.2} parent=15 // pred_region
        %p444 = scmp.lt.s32.totalorder %s27, 1
        %s445 = scalar_select %p444, %s27, 1
        %s446 = scalar_lea.vmem %s4, %s445
      $region36: #{_lambda_.2} parent=15 // pred_fallthru
        _
      // Predicated region
      $region37: #{_lambda_.2} parent=15 // pred_check
        %p447 = pneg %p181
      $region38: #{_lambda_.2} parent=15 // pred_check_branch
        %449 = sbr.rel (%p447) target = $region40
      $region39: #{_lambda_.2} parent=15 // pred_region
        %p450 = scmp.lt.s32.totalorder %s27, 1
        %s451 = scalar_select %p450, %s27, 1
        %s452 = smul.addr %s451, 4
        %s453 = smul.addr %s452, 4
        %s454 = scalar_lea.vmem %s5, %s453
      $region40: #{_lambda_.2} parent=15 // pred_fallthru
        _
      // Predicated region
      $region41: #{_lambda_.2} parent=15 // pred_check
        %p455 = pneg %p207
      $region42: #{_lambda_.2} parent=15 // pred_check_branch
        %457 = sbr.rel (%p455) target = $region44
      $region43: #{_lambda_.2} parent=15 // pred_region
        %p458 = scmp.lt.s32.totalorder %s27, 1
        %s459 = scalar_select %p458, %s27, 1
        %s460 = scalar_lea.vmem %s6, %s459
      $region44: #{_lambda_.2} parent=15 // pred_fallthru
        _
      // Predicated region
      $region45: #{_lambda_.2} parent=15 // pred_check
        %p461 = pneg %p233
      $region46: #{_lambda_.2} parent=15 // pred_check_branch
        %463 = sbr.rel (%p461) target = $region48
      $region47: #{_lambda_.2} parent=15 // pred_region
        %p464 = scmp.lt.s32.totalorder %s27, 1
        %s465 = scalar_select %p464, %s27, 1
        %s466 = scalar_lea.vmem %s7, %s465
      $region48: #{_lambda_.2} parent=15 // pred_fallthru
        _
      // Predicated region
      $region49: #{_lambda_.2} parent=15 // pred_check
        %p467 = pneg %p259
      $region50: #{_lambda_.2} parent=15 // pred_check_branch
        %469 = sbr.rel (%p467) target = $region52
      $region51: #{_lambda_.2} parent=15 // pred_region
        %p470 = scmp.lt.s32.totalorder %s27, 1
        %s471 = scalar_select %p470, %s27, 1
        %s472 = scalar_lea.vmem %s8, %s471
      $region52: #{_lambda_.2} parent=15 // pred_fallthru
        _
      // Predicated region
      $region53: #{_lambda_.2} parent=15 // pred_check
        %p473 = pneg %p285
      $region54: #{_lambda_.2} parent=15 // pred_check_branch
        %475 = sbr.rel (%p473) target = $region56
      $region55: #{_lambda_.2} parent=15 // pred_region
        %p476 = scmp.lt.s32.totalorder %s27, 1
        %s477 = scalar_select %p476, %s27, 1
        %s478 = smul.addr %s477, 4
        %s479 = smul.addr %s478, 4
        %s480 = scalar_lea.vmem %s9, %s479
      $region56: #{_lambda_.2} parent=15 // pred_fallthru
        _
      // Predicated region
      $region57: #{_lambda_.2} parent=15 // pred_check
        %p481 = pneg %p311
      $region58: #{_lambda_.2} parent=15 // pred_check_branch
        %483 = sbr.rel (%p481) target = $region60
      $region59: #{_lambda_.2} parent=15 // pred_region
        %p484 = scmp.lt.s32.totalorder %s27, 1
        %s485 = scalar_select %p484, %s27, 1
        %s486 = scalar_lea.vmem %s10, %s485
      $region60: #{_lambda_.2} parent=15 // pred_fallthru
        _
      // Predicated region
      $region61: #{_lambda_.2} parent=15 // pred_check
        %p487 = pneg %p337
      $region62: #{_lambda_.2} parent=15 // pred_check_branch
        %489 = sbr.rel (%p487) target = $region64
      $region63: #{_lambda_.2} parent=15 // pred_region
        %p490 = scmp.lt.s32.totalorder %s27, 1
        %s491 = scalar_select %p490, %s27, 1
        %s492 = smul.addr %s491, 8
        %s493 = smul.addr %s492, 4
        %s494 = scalar_lea.vmem %s11, %s493
      $region64: #{_lambda_.2} parent=15 // pred_fallthru
        _
      // Predicated region
      $region65: #{_lambda_.2} parent=15 // pred_check
        %p495 = pneg %p363
      $region66: #{_lambda_.2} parent=15 // pred_check_branch
        %497 = sbr.rel (%p495) target = $region68
      $region67: #{_lambda_.2} parent=15 // pred_region
        %p498 = scmp.lt.s32.totalorder %s27, 1
        %s499 = scalar_select %p498, %s27, 1
        %s500 = scalar_lea.vmem %s12, %s499
      $region68: #{_lambda_.2} parent=15 // pred_fallthru
        _
    $region16: #{_lambda_.2} parent=5 // pred_fallthru
      _
    %p501 = scmp.le.s32.totalorder 1, %s19
    %p502 = scmp.lt.s32.totalorder %s19, 9
    %p503 = pnand %p501, %p502
    %p504 = pneg %p503
    // Predicated region
    $region69: #{_lambda_.2} parent=5 // pred_check
      _
    $region70: #{_lambda_.2} parent=5 // pred_check_branch
      %506 = sbr.rel (%p503) target = $region72
    $region71: #{_lambda_.2} parent=5 // pred_region
      %s507 = ssub.s32 %s19, 1
      %p508 = scmp.lt.s32.totalorder %s28, 3
      %s509 = scalar_select %p508, %s28, 3
      %s510 = smul.addr %s509, 4
      %s511 = scalar_lea.vmem %s0, %s510
      %p512 = pneg %p57
      %p513 = pneg %p54
      %p514 = scmp.lt.s32.totalorder %s29, 1
      %s515 = scalar_select %p514, %s29, 1
      %s516 = scalar_lea.vmem %s1, %s515
      %p517 = pneg %p83
      %p518 = pneg %p80
      %p519 = scmp.lt.s32.totalorder %s29, 1
      %s520 = scalar_select %p519, %s29, 1
      %s521 = scalar_lea.vmem %s2, %s520
      %p522 = pneg %p109
      %p523 = pneg %p106
      %p524 = scmp.lt.s32.totalorder %s29, 1
      %s525 = scalar_select %p524, %s29, 1
      %s526 = smul.addr %s525, 4
      %s527 = smul.addr %s526, 4
      %s528 = scalar_lea.vmem %s3, %s527
      %p529 = pneg %p135
      %p530 = pneg %p132
      %p531 = scmp.lt.s32.totalorder %s29, 1
      %s532 = scalar_select %p531, %s29, 1
      %s533 = scalar_lea.vmem %s4, %s532
      %p534 = pneg %p161
      %p535 = pneg %p158
      %p536 = scmp.lt.s32.totalorder %s29, 1
      %s537 = scalar_select %p536, %s29, 1
      %s538 = smul.addr %s537, 4
      %s539 = smul.addr %s538, 4
      %s540 = scalar_lea.vmem %s5, %s539
      %p541 = pneg %p187
      %p542 = pneg %p184
      %p543 = scmp.lt.s32.totalorder %s29, 1
      %s544 = scalar_select %p543, %s29, 1
      %s545 = scalar_lea.vmem %s6, %s544
      %p546 = pneg %p213
      %p547 = pneg %p210
      %p548 = scmp.lt.s32.totalorder %s29, 1
      %s549 = scalar_select %p548, %s29, 1
      %s550 = scalar_lea.vmem %s7, %s549
      %p551 = pneg %p239
      %p552 = pneg %p236
      %p553 = scmp.lt.s32.totalorder %s29, 1
      %s554 = scalar_select %p553, %s29, 1
      %s555 = scalar_lea.vmem %s8, %s554
      %p556 = pneg %p265
      %p557 = pneg %p262
      %p558 = scmp.lt.s32.totalorder %s29, 1
      %s559 = scalar_select %p558, %s29, 1
      %s560 = smul.addr %s559, 4
      %s561 = smul.addr %s560, 4
      %s562 = scalar_lea.vmem %s9, %s561
      %p563 = pneg %p291
      %p564 = pneg %p288
      %p565 = scmp.lt.s32.totalorder %s29, 1
      %s566 = scalar_select %p565, %s29, 1
      %s567 = scalar_lea.vmem %s10, %s566
      %p568 = pneg %p317
      %p569 = pneg %p314
      %p570 = scmp.lt.s32.totalorder %s29, 1
      %s571 = scalar_select %p570, %s29, 1
      %s572 = smul.addr %s571, 8
      %s573 = smul.addr %s572, 4
      %s574 = scalar_lea.vmem %s11, %s573
      %p575 = pneg %p343
      %p576 = pneg %p340
      %p577 = scmp.lt.s32.totalorder %s29, 1
      %s578 = scalar_select %p577, %s29, 1
      %s579 = scalar_lea.vmem %s12, %s578
      %p580 = pneg %p369
      %p581 = pneg %p366
      %p582 = pneg %p395
      %p583 = pneg %p392
      %p584 = scmp.lt.s32.totalorder %s28, 3
      %s585 = scalar_select %p584, %s28, 3
      %s586 = smul.addr %s585, 4
      %s587 = scalar_lea.vmem %s13, %s586
      %p588 = scmp.lt.s32.totalorder %s28, 3
      %s589 = scalar_select %p588, %s28, 3
      %s590 = smul.addr %s589, 4
      %s591 = scalar_lea.vmem %s0, %s590
      %p592 = scmp.lt.s32.totalorder %s29, 1
      %s593 = scalar_select %p592, %s29, 1
      %s594 = scalar_lea.vmem %s1, %s593
      %p595 = scmp.lt.s32.totalorder %s29, 1
      %s596 = scalar_select %p595, %s29, 1
      %s597 = scalar_lea.vmem %s2, %s596
      %p598 = scmp.lt.s32.totalorder %s29, 1
      %s599 = scalar_select %p598, %s29, 1
      %s600 = smul.addr %s599, 4
      %s601 = smul.addr %s600, 4
      %s602 = scalar_lea.vmem %s3, %s601
      %p603 = scmp.lt.s32.totalorder %s29, 1
      %s604 = scalar_select %p603, %s29, 1
      %s605 = scalar_lea.vmem %s4, %s604
      %p606 = scmp.lt.s32.totalorder %s29, 1
      %s607 = scalar_select %p606, %s29, 1
      %s608 = smul.addr %s607, 4
      %s609 = smul.addr %s608, 4
      %s610 = scalar_lea.vmem %s5, %s609
      %p611 = scmp.lt.s32.totalorder %s29, 1
      %s612 = scalar_select %p611, %s29, 1
      %s613 = scalar_lea.vmem %s6, %s612
      %p614 = scmp.lt.s32.totalorder %s29, 1
      %s615 = scalar_select %p614, %s29, 1
      %s616 = scalar_lea.vmem %s7, %s615
      %p617 = scmp.lt.s32.totalorder %s29, 1
      %s618 = scalar_select %p617, %s29, 1
      %s619 = scalar_lea.vmem %s8, %s618
      %p620 = scmp.lt.s32.totalorder %s29, 1
      %s621 = scalar_select %p620, %s29, 1
      %s622 = smul.addr %s621, 4
      %s623 = smul.addr %s622, 4
      %s624 = scalar_lea.vmem %s9, %s623
      %p625 = scmp.lt.s32.totalorder %s29, 1
      %s626 = scalar_select %p625, %s29, 1
      %s627 = scalar_lea.vmem %s10, %s626
      %p628 = scmp.lt.s32.totalorder %s29, 1
      %s629 = scalar_select %p628, %s29, 1
      %s630 = smul.addr %s629, 8
      %s631 = smul.addr %s630, 4
      %s632 = scalar_lea.vmem %s11, %s631
      %p633 = scmp.lt.s32.totalorder %s29, 1
      %s634 = scalar_select %p633, %s29, 1
      %s635 = scalar_lea.vmem %s12, %s634
      %p636 = scmp.lt.s32.totalorder %s28, 3
      %s637 = scalar_select %p636, %s28, 3
      %s638 = smul.addr %s637, 4
      %s639 = scalar_lea.vmem %s13, %s638
      %p641 = scmp.eq.s32.totalorder %s29, 0
      // Predicated region
      $region73: #{_lambda_.2} parent=71 // pred_check
        %p642 = pneg %p641
      $region74: #{_lambda_.2} parent=71 // pred_check_branch
        %644 = sbr.rel (%p642) target = $region76
      $region75: #{_lambda_.2} parent=71 // pred_region
        %v645 = vld [vmem:[%s591] sm:$0xf]
        %v646 = vunpack.c.l.bf16 %v645
        %vm647 = vcmask 261120
        %648 = vst.msk [vmem:[#allocation2] sm:$0xff] %vm647, %v646
      $region76: #{_lambda_.2} parent=71 // pred_fallthru
        _
      %v649 = vld [vmem:[#allocation2] sm:$0xff]
      %v650 = vld [vmem:[%s594] sm:$0x1]
      %v651 = vld [vmem:[%s597] sm:$0x1]
      %vm652 = vcmask 261120
      %v653 = vsel %vm652, %v649, 0.0
      %654 = vadd.xlane.f32.xlu0 %v653
      %v655 = vpop.xlane.xlu0 %654
      %v656 = vrcp.pop 32.0
      %v657 = vmul.f32 %v655, %v656
      %v658 = vsub.f32 %v649, %v657
      %v659 = vmul.f32 %v658, %v658
      %v660 = vsel %vm652, %v659, 0.0
      %661 = vadd.xlane.f32.xlu0 %v660
      %v662 = vpop.xlane.xlu0 %661
      %v663 = vmul.f32 %v662, %v656
      %v664 = vadd.f32 %v663, 1e-05
      %v665 = vrsqrt.pop %v664
      %v666 = vmul.f32 %v658, %v665
      %v668 = vlaneseq
      %v669 = vshrl.u32 %v668, 7
      %v670 = vsub.s32 0, %v669
      %v671 = vrot.slane %v650, %v670
      %v673 = vmul.f32 %v666, %v671
      %v675 = vlaneseq
      %v676 = vshrl.u32 %v675, 7
      %v677 = vsub.s32 0, %v676
      %v678 = vrot.slane %v651, %v677
      %v680 = vadd.f32 %v673, %v678
      %v681 = vpack.c.bf16 %v680, %v680
      %v682 = vld [vmem:[%s602] sm:$0xf]
      %v683 = vld [vmem:[%s602 + $0x4] sm:$0xf]
      %v684 = vld [vmem:[%s602 + $0x8] sm:$0xf]
      %v685 = vld [vmem:[%s602 + $0xc] sm:$0xf]
      %v686 = vld [vmem:[%s605] sm:$0x1]
      %v688 = vlaneseq
      %v689 = vshrl.u32 %v688, 7
      %v690 = vsub.s32 0, %v689
      %v691 = vrot.slane %v686, %v690
      %v697 = vunpack.c.l.b16 %v682
      %v698 = vunpack.c.l.b16 %v683
      %v699 = vunpack.c.l.b16 %v684
      %v700 = vunpack.c.l.b16 %v685
      %v701 = vpack.c.b16 %v698, %v697
      %v702 = vpack.c.b16 %v700, %v699
      %v706 = vsel %vm652, %v681, 0
      %708 = vmatprep.subr.bf16.mxu0 0
      %709 = vmatpush1.bf16.msra.mxu0 0
      %710 = vmatprep.subr.bf16.mxu0 0
      %711 = vmatpush1.bf16.msra.mxu0 0
      %712 = vmatprep.subr.bf16.mxu0 0
      %713 = vmatpush1.bf16.msra.mxu0 0
      %714 = vmatprep.subr.bf16.mxu0 0
      %715 = vmatpush1.bf16.msra.mxu0 0
      %716 = vmatprep.subr.bf16.mxu0 0
      %717 = vmatpush1.bf16.msra.mxu0 0
      %718 = vmatprep.subr.bf16.mxu0 0
      %719 = vmatpush1.bf16.msra.mxu0 0
      %720 = vmatprep.subr.bf16.mxu0 0
      %721 = vmatpush1.bf16.msra.mxu0 %v702
      %722 = vmatprep.subr.bf16.mxu0 0
      %723 = vmatpush1.bf16.msra.mxu0 %v701
      %724 = vmatprep.subr.bf16.mxu0 0
      %725 = vmatpush2.bf16.msra.mxu0 0
      %726 = vmatprep.subr.bf16.mxu0 0
      %727 = vmatpush2.bf16.msra.mxu0 0
      %728 = vmatprep.subr.bf16.mxu0 0
      %729 = vmatpush2.bf16.msra.mxu0 0
      %730 = vmatprep.subr.bf16.mxu0 0
      %731 = vmatpush2.bf16.msra.mxu0 0
      %732 = vmatprep.subr.bf16.mxu0 0
      %733 = vmatpush2.bf16.msra.mxu0 0
      %734 = vmatprep.subr.bf16.mxu0 0
      %735 = vmatpush2.bf16.msra.mxu0 0
      %736 = vmatprep.subr.bf16.mxu0 0
      %737 = vmatpush2.bf16.msra.mxu0 0
      %738 = vmatprep.subr.bf16.mxu0 0
      %739 = vmatpush2.bf16.msra.mxu0 0
      %740 = vmatprep.mubr.bf16.mxu0 0
      %741 = vmatmul.mubr.bf16.gmra.mxu0 %v706
      %v742 = vpop.f32.mrf.mxu0
      %v743 = vadd.f32 %v691, %v742
      %v744 = vpop.f32.mrf.mxu0
      %v745 = vpop.f32.mrf.mxu0
      %v746 = vpop.f32.mrf.mxu0
      %747 = vdwg.mxu0
      %749 = vrot.lane.b32.xlu0 %v743, 120
      %v750 = vpop.permute.xlu0 %749
      %752 = vrot.lane.b32.xlu0 %v743, 112
      %v753 = vpop.permute.xlu0 %752
      %755 = vrot.lane.b32.xlu0 %v743, 104
      %v756 = vpop.permute.xlu0 %755
      %v758 = vpack.c.bf16 %v743, %v743
      %v759 = vpack.c.bf16 %v750, %v750
      %v760 = vpack.c.bf16 %v753, %v753
      %v761 = vpack.c.bf16 %v756, %v756
      %v762 = vlaneseq
      %v763 = vshrl.u32 %v762, 7
      %v764 = vlaneseq
      %v765 = vand.u32 %v764, 127
      %vm766 = vcmp.le.s32.totalorder %v765, %v763
      %v767 = vsel %vm766, 0.0, -1e+30
      %769 = vrot.lane.b32.xlu0 %v758, 96
      %v770 = vpop.permute.xlu0 %769
      %vm771 = vcmask 64512
      %v773 = vsel %vm771, %v758, 0
      %v776 = vsel %vm771, %v770, 0
      %778 = vmatprep.subr.bf16.mxu0 0
      %779 = vmatpush1.bf16.xpose.msra.mxu0 0
      %780 = vmatprep.subr.bf16.mxu0 0
      %781 = vmatpush1.bf16.xpose.msra.mxu0 0
      %782 = vmatprep.subr.bf16.mxu0 0
      %783 = vmatpush1.bf16.xpose.msra.mxu0 0
      %784 = vmatprep.subr.bf16.mxu0 0
      %785 = vmatpush1.bf16.xpose.msra.mxu0 0
      %786 = vmatprep.subr.bf16.mxu0 0
      %787 = vmatpush1.bf16.xpose.msra.mxu0 0
      %788 = vmatprep.subr.bf16.mxu0 0
      %789 = vmatpush1.bf16.xpose.msra.mxu0 0
      %790 = vmatprep.subr.bf16.mxu0 0
      %791 = vmatpush1.bf16.xpose.msra.mxu0 0
      %792 = vmatprep.subr.bf16.mxu0 0
      %793 = vmatpush1.bf16.xpose.msra.mxu0 %v776
      %794 = vmatprep.subr.bf16.mxu0 0
      %795 = vmatpush2.bf16.xpose.msra.mxu0 0
      %796 = vmatprep.subr.bf16.mxu0 0
      %797 = vmatpush2.bf16.xpose.msra.mxu0 0
      %798 = vmatprep.subr.bf16.mxu0 0
      %799 = vmatpush2.bf16.xpose.msra.mxu0 0
      %800 = vmatprep.subr.bf16.mxu0 0
      %801 = vmatpush2.bf16.xpose.msra.mxu0 0
      %802 = vmatprep.subr.bf16.mxu0 0
      %803 = vmatpush2.bf16.xpose.msra.mxu0 0
      %804 = vmatprep.subr.bf16.mxu0 0
      %805 = vmatpush2.bf16.xpose.msra.mxu0 0
      %806 = vmatprep.subr.bf16.mxu0 0
      %807 = vmatpush2.bf16.xpose.msra.mxu0 0
      %808 = vmatprep.subr.bf16.mxu0 0
      %809 = vmatpush2.bf16.xpose.msra.mxu0 0
      %810 = vmatprep.mubr.bf16.mxu0 0
      %811 = vmatmul.mubr.bf16.gmra.mxu0 %v773
      %v812 = vpop.f32.mrf.mxu0
      %v813 = vadd.f32 0.0, %v812
      %v814 = vpop.f32.mrf.mxu0
      %v815 = vpop.f32.mrf.mxu0
      %v816 = vpop.f32.mrf.mxu0
      %817 = vdwg.mxu0
      %819 = vrot.lane.b32.xlu0 %v759, 96
      %v820 = vpop.permute.xlu0 %819
      %v822 = vsel %vm771, %v759, 0
      %v825 = vsel %vm771, %v820, 0
      %827 = vmatprep.subr.bf16.mxu0 0
      %828 = vmatpush1.bf16.xpose.msra.mxu0 0
      %829 = vmatprep.subr.bf16.mxu0 0
      %830 = vmatpush1.bf16.xpose.msra.mxu0 0
      %831 = vmatprep.subr.bf16.mxu0 0
      %832 = vmatpush1.bf16.xpose.msra.mxu0 0
      %833 = vmatprep.subr.bf16.mxu0 0
      %834 = vmatpush1.bf16.xpose.msra.mxu0 0
      %835 = vmatprep.subr.bf16.mxu0 0
      %836 = vmatpush1.bf16.xpose.msra.mxu0 0
      %837 = vmatprep.subr.bf16.mxu0 0
      %838 = vmatpush1.bf16.xpose.msra.mxu0 0
      %839 = vmatprep.subr.bf16.mxu0 0
      %840 = vmatpush1.bf16.xpose.msra.mxu0 0
      %841 = vmatprep.subr.bf16.mxu0 0
      %842 = vmatpush1.bf16.xpose.msra.mxu0 %v825
      %843 = vmatprep.subr.bf16.mxu0 0
      %844 = vmatpush2.bf16.xpose.msra.mxu0 0
      %845 = vmatprep.subr.bf16.mxu0 0
      %846 = vmatpush2.bf16.xpose.msra.mxu0 0
      %847 = vmatprep.subr.bf16.mxu0 0
      %848 = vmatpush2.bf16.xpose.msra.mxu0 0
      %849 = vmatprep.subr.bf16.mxu0 0
      %850 = vmatpush2.bf16.xpose.msra.mxu0 0
      %851 = vmatprep.subr.bf16.mxu0 0
      %852 = vmatpush2.bf16.xpose.msra.mxu0 0
      %853 = vmatprep.subr.bf16.mxu0 0
      %854 = vmatpush2.bf16.xpose.msra.mxu0 0
      %855 = vmatprep.subr.bf16.mxu0 0
      %856 = vmatpush2.bf16.xpose.msra.mxu0 0
      %857 = vmatprep.subr.bf16.mxu0 0
      %858 = vmatpush2.bf16.xpose.msra.mxu0 0
      %859 = vmatprep.mubr.bf16.mxu0 0
      %860 = vmatmul.mubr.bf16.gmra.mxu0 %v822
      %v861 = vpop.f32.mrf.mxu0
      %v862 = vadd.f32 0.0, %v861
      %v863 = vpop.f32.mrf.mxu0
      %v864 = vpop.f32.mrf.mxu0
      %v865 = vpop.f32.mrf.mxu0
      %866 = vdwg.mxu0
      %868 = vrot.lane.b32.xlu0 %v760, 96
      %v869 = vpop.permute.xlu0 %868
      %v871 = vsel %vm771, %v760, 0
      %v874 = vsel %vm771, %v869, 0
      %876 = vmatprep.subr.bf16.mxu0 0
      %877 = vmatpush1.bf16.xpose.msra.mxu0 0
      %878 = vmatprep.subr.bf16.mxu0 0
      %879 = vmatpush1.bf16.xpose.msra.mxu0 0
      %880 = vmatprep.subr.bf16.mxu0 0
      %881 = vmatpush1.bf16.xpose.msra.mxu0 0
      %882 = vmatprep.subr.bf16.mxu0 0
      %883 = vmatpush1.bf16.xpose.msra.mxu0 0
      %884 = vmatprep.subr.bf16.mxu0 0
      %885 = vmatpush1.bf16.xpose.msra.mxu0 0
      %886 = vmatprep.subr.bf16.mxu0 0
      %887 = vmatpush1.bf16.xpose.msra.mxu0 0
      %888 = vmatprep.subr.bf16.mxu0 0
      %889 = vmatpush1.bf16.xpose.msra.mxu0 0
      %890 = vmatprep.subr.bf16.mxu0 0
      %891 = vmatpush1.bf16.xpose.msra.mxu0 %v874
      %892 = vmatprep.subr.bf16.mxu0 0
      %893 = vmatpush2.bf16.xpose.msra.mxu0 0
      %894 = vmatprep.subr.bf16.mxu0 0
      %895 = vmatpush2.bf16.xpose.msra.mxu0 0
      %896 = vmatprep.subr.bf16.mxu0 0
      %897 = vmatpush2.bf16.xpose.msra.mxu0 0
      %898 = vmatprep.subr.bf16.mxu0 0
      %899 = vmatpush2.bf16.xpose.msra.mxu0 0
      %900 = vmatprep.subr.bf16.mxu0 0
      %901 = vmatpush2.bf16.xpose.msra.mxu0 0
      %902 = vmatprep.subr.bf16.mxu0 0
      %903 = vmatpush2.bf16.xpose.msra.mxu0 0
      %904 = vmatprep.subr.bf16.mxu0 0
      %905 = vmatpush2.bf16.xpose.msra.mxu0 0
      %906 = vmatprep.subr.bf16.mxu0 0
      %907 = vmatpush2.bf16.xpose.msra.mxu0 0
      %908 = vmatprep.mubr.bf16.mxu0 0
      %909 = vmatmul.mubr.bf16.gmra.mxu0 %v871
      %v910 = vpop.f32.mrf.mxu0
      %v911 = vadd.f32 0.0, %v910
      %v912 = vpop.f32.mrf.mxu0
      %v913 = vpop.f32.mrf.mxu0
      %v914 = vpop.f32.mrf.mxu0
      %915 = vdwg.mxu0
      %917 = vrot.lane.b32.xlu0 %v761, 96
      %v918 = vpop.permute.xlu0 %917
      %v920 = vsel %vm771, %v761, 0
      %v923 = vsel %vm771, %v918, 0
      %925 = vmatprep.subr.bf16.mxu0 0
      %926 = vmatpush1.bf16.xpose.msra.mxu0 0
      %927 = vmatprep.subr.bf16.mxu0 0
      %928 = vmatpush1.bf16.xpose.msra.mxu0 0
      %929 = vmatprep.subr.bf16.mxu0 0
      %930 = vmatpush1.bf16.xpose.msra.mxu0 0
      %931 = vmatprep.subr.bf16.mxu0 0
      %932 = vmatpush1.bf16.xpose.msra.mxu0 0
      %933 = vmatprep.subr.bf16.mxu0 0
      %934 = vmatpush1.bf16.xpose.msra.mxu0 0
      %935 = vmatprep.subr.bf16.mxu0 0
      %936 = vmatpush1.bf16.xpose.msra.mxu0 0
      %937 = vmatprep.subr.bf16.mxu0 0
      %938 = vmatpush1.bf16.xpose.msra.mxu0 0
      %939 = vmatprep.subr.bf16.mxu0 0
      %940 = vmatpush1.bf16.xpose.msra.mxu0 %v923
      %941 = vmatprep.subr.bf16.mxu0 0
      %942 = vmatpush2.bf16.xpose.msra.mxu0 0
      %943 = vmatprep.subr.bf16.mxu0 0
      %944 = vmatpush2.bf16.xpose.msra.mxu0 0
      %945 = vmatprep.subr.bf16.mxu0 0
      %946 = vmatpush2.bf16.xpose.msra.mxu0 0
      %947 = vmatprep.subr.bf16.mxu0 0
      %948 = vmatpush2.bf16.xpose.msra.mxu0 0
      %949 = vmatprep.subr.bf16.mxu0 0
      %950 = vmatpush2.bf16.xpose.msra.mxu0 0
      %951 = vmatprep.subr.bf16.mxu0 0
      %952 = vmatpush2.bf16.xpose.msra.mxu0 0
      %953 = vmatprep.subr.bf16.mxu0 0
      %954 = vmatpush2.bf16.xpose.msra.mxu0 0
      %955 = vmatprep.subr.bf16.mxu0 0
      %956 = vmatpush2.bf16.xpose.msra.mxu0 0
      %957 = vmatprep.mubr.bf16.mxu0 0
      %958 = vmatmul.mubr.bf16.gmra.mxu0 %v920
      %v959 = vpop.f32.mrf.mxu0
      %v960 = vadd.f32 0.0, %v959
      %v961 = vpop.f32.mrf.mxu0
      %v962 = vpop.f32.mrf.mxu0
      %v963 = vpop.f32.mrf.mxu0
      %964 = vdwg.mxu0
      %v965 = vmul.f32 %v813, 0.35355338
      %v966 = vmul.f32 %v862, 0.35355338
      %v967 = vmul.f32 %v911, 0.35355338
      %v968 = vmul.f32 %v960, 0.35355338
      %v969 = vadd.f32 %v965, %v767
      %v970 = vadd.f32 %v966, %v767
      %v971 = vadd.f32 %v967, %v767
      %v972 = vadd.f32 %v968, %v767
      %v973 = vsel %vm771, %v969, -inf
      %974 = vmax.xlane.f32.xlu0 %v973
      %v975 = vpop.xlane.xlu0 %974
      %v976 = vsel %vm771, %v970, -inf
      %977 = vmax.xlane.f32.xlu0 %v976
      %v978 = vpop.xlane.xlu0 %977
      %v979 = vsel %vm771, %v971, -inf
      %980 = vmax.xlane.f32.xlu0 %v979
      %v981 = vpop.xlane.xlu0 %980
      %v982 = vsel %vm771, %v972, -inf
      %983 = vmax.xlane.f32.xlu0 %v982
      %v984 = vpop.xlane.xlu0 %983
      %v985 = vsub.f32 %v969, %v975
      %v986 = vsub.f32 %v970, %v978
      %v987 = vsub.f32 %v971, %v981
      %v988 = vsub.f32 %v972, %v984
      %v989 = vmul.f32 %v985, 1.442695
      %v990 = vpow.pop %v989
      %v991 = vmul.f32 %v986, 1.442695
      %v992 = vpow.pop %v991
      %v993 = vmul.f32 %v987, 1.442695
      %v994 = vpow.pop %v993
      %v995 = vmul.f32 %v988, 1.442695
      %v996 = vpow.pop %v995
      %v997 = vsel %vm771, %v990, 0.0
      %998 = vadd.xlane.f32.xlu0 %v997
      %v999 = vpop.xlane.xlu0 %998
      %v1000 = vsel %vm771, %v992, 0.0
      %1001 = vadd.xlane.f32.xlu0 %v1000
      %v1002 = vpop.xlane.xlu0 %1001
      %v1003 = vsel %vm771, %v994, 0.0
      %1004 = vadd.xlane.f32.xlu0 %v1003
      %v1005 = vpop.xlane.xlu0 %1004
      %v1006 = vsel %vm771, %v996, 0.0
      %1007 = vadd.xlane.f32.xlu0 %v1006
      %v1008 = vpop.xlane.xlu0 %1007
      %v1009 = vpack.c.bf16 %v990, %v990
      %v1010 = vpack.c.bf16 %v992, %v992
      %v1011 = vpack.c.bf16 %v994, %v994
      %v1012 = vpack.c.bf16 %v996, %v996
      %1013 = vrot.lane.b32.xlu0 %v758, 64
      %v1014 = vpop.permute.xlu0 %1013
      %v1016 = vsel %vm771, %v1009, 0
      %vm1018 = vcmask 1043456
      %v1020 = vsel %vm1018, %v1014, 0
      %1022 = vmatprep.subr.bf16.mxu0 0
      %1023 = vmatpush1.bf16.msra.mxu0 0
      %1024 = vmatprep.subr.bf16.mxu0 0
      %1025 = vmatpush1.bf16.msra.mxu0 0
      %1026 = vmatprep.subr.bf16.mxu0 0
      %1027 = vmatpush1.bf16.msra.mxu0 0
      %1028 = vmatprep.subr.bf16.mxu0 0
      %1029 = vmatpush1.bf16.msra.mxu0 0
      %1030 = vmatprep.subr.bf16.mxu0 0
      %1031 = vmatpush1.bf16.msra.mxu0 0
      %1032 = vmatprep.subr.bf16.mxu0 0
      %1033 = vmatpush1.bf16.msra.mxu0 0
      %1034 = vmatprep.subr.bf16.mxu0 0
      %1035 = vmatpush1.bf16.msra.mxu0 0
      %1036 = vmatprep.subr.bf16.mxu0 0
      %1037 = vmatpush1.bf16.msra.mxu0 %v1020
      %1038 = vmatprep.subr.bf16.mxu0 0
      %1039 = vmatpush2.bf16.msra.mxu0 0
      %1040 = vmatprep.subr.bf16.mxu0 0
      %1041 = vmatpush2.bf16.msra.mxu0 0
      %1042 = vmatprep.subr.bf16.mxu0 0
      %1043 = vmatpush2.bf16.msra.mxu0 0
      %1044 = vmatprep.subr.bf16.mxu0 0
      %1045 = vmatpush2.bf16.msra.mxu0 0
      %1046 = vmatprep.subr.bf16.mxu0 0
      %1047 = vmatpush2.bf16.msra.mxu0 0
      %1048 = vmatprep.subr.bf16.mxu0 0
      %1049 = vmatpush2.bf16.msra.mxu0 0
      %1050 = vmatprep.subr.bf16.mxu0 0
      %1051 = vmatpush2.bf16.msra.mxu0 0
      %1052 = vmatprep.subr.bf16.mxu0 0
      %1053 = vmatpush2.bf16.msra.mxu0 0
      %1054 = vmatprep.mubr.bf16.mxu0 0
      %1055 = vmatmul.mubr.bf16.gmra.mxu0 %v1016
      %v1056 = vpop.f32.mrf.mxu0
      %v1057 = vadd.f32 0.0, %v1056
      %v1058 = vpop.f32.mrf.mxu0
      %v1059 = vpop.f32.mrf.mxu0
      %v1060 = vpop.f32.mrf.mxu0
      %1061 = vdwg.mxu0
      %1062 = vrot.lane.b32.xlu0 %v759, 64
      %v1063 = vpop.permute.xlu0 %1062
      %v1065 = vsel %vm771, %v1010, 0
      %v1068 = vsel %vm1018, %v1063, 0
      %1070 = vmatprep.subr.bf16.mxu0 0
      %1071 = vmatpush1.bf16.msra.mxu0 0
      %1072 = vmatprep.subr.bf16.mxu0 0
      %1073 = vmatpush1.bf16.msra.mxu0 0
      %1074 = vmatprep.subr.bf16.mxu0 0
      %1075 = vmatpush1.bf16.msra.mxu0 0
      %1076 = vmatprep.subr.bf16.mxu0 0
      %1077 = vmatpush1.bf16.msra.mxu0 0
      %1078 = vmatprep.subr.bf16.mxu0 0
      %1079 = vmatpush1.bf16.msra.mxu0 0
      %1080 = vmatprep.subr.bf16.mxu0 0
      %1081 = vmatpush1.bf16.msra.mxu0 0
      %1082 = vmatprep.subr.bf16.mxu0 0
      %1083 = vmatpush1.bf16.msra.mxu0 0
      %1084 = vmatprep.subr.bf16.mxu0 0
      %1085 = vmatpush1.bf16.msra.mxu0 %v1068
      %1086 = vmatprep.subr.bf16.mxu0 0
      %1087 = vmatpush2.bf16.msra.mxu0 0
      %1088 = vmatprep.subr.bf16.mxu0 0
      %1089 = vmatpush2.bf16.msra.mxu0 0
      %1090 = vmatprep.subr.bf16.mxu0 0
      %1091 = vmatpush2.bf16.msra.mxu0 0
      %1092 = vmatprep.subr.bf16.mxu0 0
      %1093 = vmatpush2.bf16.msra.mxu0 0
      %1094 = vmatprep.subr.bf16.mxu0 0
      %1095 = vmatpush2.bf16.msra.mxu0 0
      %1096 = vmatprep.subr.bf16.mxu0 0
      %1097 = vmatpush2.bf16.msra.mxu0 0
      %1098 = vmatprep.subr.bf16.mxu0 0
      %1099 = vmatpush2.bf16.msra.mxu0 0
      %1100 = vmatprep.subr.bf16.mxu0 0
      %1101 = vmatpush2.bf16.msra.mxu0 0
      %1102 = vmatprep.mubr.bf16.mxu0 0
      %1103 = vmatmul.mubr.bf16.gmra.mxu0 %v1065
      %v1104 = vpop.f32.mrf.mxu0
      %v1105 = vadd.f32 0.0, %v1104
      %v1106 = vpop.f32.mrf.mxu0
      %v1107 = vpop.f32.mrf.mxu0
      %v1108 = vpop.f32.mrf.mxu0
      %1109 = vdwg.mxu0
      %1110 = vrot.lane.b32.xlu0 %v760, 64
      %v1111 = vpop.permute.xlu0 %1110
      %v1113 = vsel %vm771, %v1011, 0
      %v1116 = vsel %vm1018, %v1111, 0
      %1118 = vmatprep.subr.bf16.mxu0 0
      %1119 = vmatpush1.bf16.msra.mxu0 0
      %1120 = vmatprep.subr.bf16.mxu0 0
      %1121 = vmatpush1.bf16.msra.mxu0 0
      %1122 = vmatprep.subr.bf16.mxu0 0
      %1123 = vmatpush1.bf16.msra.mxu0 0
      %1124 = vmatprep.subr.bf16.mxu0 0
      %1125 = vmatpush1.bf16.msra.mxu0 0
      %1126 = vmatprep.subr.bf16.mxu0 0
      %1127 = vmatpush1.bf16.msra.mxu0 0
      %1128 = vmatprep.subr.bf16.mxu0 0
      %1129 = vmatpush1.bf16.msra.mxu0 0
      %1130 = vmatprep.subr.bf16.mxu0 0
      %1131 = vmatpush1.bf16.msra.mxu0 0
      %1132 = vmatprep.subr.bf16.mxu0 0
      %1133 = vmatpush1.bf16.msra.mxu0 %v1116
      %1134 = vmatprep.subr.bf16.mxu0 0
      %1135 = vmatpush2.bf16.msra.mxu0 0
      %1136 = vmatprep.subr.bf16.mxu0 0
      %1137 = vmatpush2.bf16.msra.mxu0 0
      %1138 = vmatprep.subr.bf16.mxu0 0
      %1139 = vmatpush2.bf16.msra.mxu0 0
      %1140 = vmatprep.subr.bf16.mxu0 0
      %1141 = vmatpush2.bf16.msra.mxu0 0
      %1142 = vmatprep.subr.bf16.mxu0 0
      %1143 = vmatpush2.bf16.msra.mxu0 0
      %1144 = vmatprep.subr.bf16.mxu0 0
      %1145 = vmatpush2.bf16.msra.mxu0 0
      %1146 = vmatprep.subr.bf16.mxu0 0
      %1147 = vmatpush2.bf16.msra.mxu0 0
      %1148 = vmatprep.subr.bf16.mxu0 0
      %1149 = vmatpush2.bf16.msra.mxu0 0
      %1150 = vmatprep.mubr.bf16.mxu0 0
      %1151 = vmatmul.mubr.bf16.gmra.mxu0 %v1113
      %v1152 = vpop.f32.mrf.mxu0
      %v1153 = vadd.f32 0.0, %v1152
      %v1154 = vpop.f32.mrf.mxu0
      %v1155 = vpop.f32.mrf.mxu0
      %v1156 = vpop.f32.mrf.mxu0
      %1157 = vdwg.mxu0
      %1158 = vrot.lane.b32.xlu0 %v761, 64
      %v1159 = vpop.permute.xlu0 %1158
      %v1161 = vsel %vm771, %v1012, 0
      %v1164 = vsel %vm1018, %v1159, 0
      %1166 = vmatprep.subr.bf16.mxu0 0
      %1167 = vmatpush1.bf16.msra.mxu0 0
      %1168 = vmatprep.subr.bf16.mxu0 0
      %1169 = vmatpush1.bf16.msra.mxu0 0
      %1170 = vmatprep.subr.bf16.mxu0 0
      %1171 = vmatpush1.bf16.msra.mxu0 0
      %1172 = vmatprep.subr.bf16.mxu0 0
      %1173 = vmatpush1.bf16.msra.mxu0 0
      %1174 = vmatprep.subr.bf16.mxu0 0
      %1175 = vmatpush1.bf16.msra.mxu0 0
      %1176 = vmatprep.subr.bf16.mxu0 0
      %1177 = vmatpush1.bf16.msra.mxu0 0
      %1178 = vmatprep.subr.bf16.mxu0 0
      %1179 = vmatpush1.bf16.msra.mxu0 0
      %1180 = vmatprep.subr.bf16.mxu0 0
      %1181 = vmatpush1.bf16.msra.mxu0 %v1164
      %1182 = vmatprep.subr.bf16.mxu0 0
      %1183 = vmatpush2.bf16.msra.mxu0 0
      %1184 = vmatprep.subr.bf16.mxu0 0
      %1185 = vmatpush2.bf16.msra.mxu0 0
      %1186 = vmatprep.subr.bf16.mxu0 0
      %1187 = vmatpush2.bf16.msra.mxu0 0
      %1188 = vmatprep.subr.bf16.mxu0 0
      %1189 = vmatpush2.bf16.msra.mxu0 0
      %1190 = vmatprep.subr.bf16.mxu0 0
      %1191 = vmatpush2.bf16.msra.mxu0 0
      %1192 = vmatprep.subr.bf16.mxu0 0
      %1193 = vmatpush2.bf16.msra.mxu0 0
      %1194 = vmatprep.subr.bf16.mxu0 0
      %1195 = vmatpush2.bf16.msra.mxu0 0
      %1196 = vmatprep.subr.bf16.mxu0 0
      %1197 = vmatpush2.bf16.msra.mxu0 0
      %1198 = vmatprep.mubr.bf16.mxu0 0
      %1199 = vmatmul.mubr.bf16.gmra.mxu0 %v1161
      %v1200 = vpop.f32.mrf.mxu0
      %v1201 = vadd.f32 0.0, %v1200
      %v1202 = vpop.f32.mrf.mxu0
      %v1203 = vpop.f32.mrf.mxu0
      %v1204 = vpop.f32.mrf.mxu0
      %1205 = vdwg.mxu0
      %v1206 = vrcp.pop %v999
      %v1207 = vrcp.pop %v1002
      %v1208 = vrcp.pop %v1005
      %v1209 = vrcp.pop %v1008
      %v1210 = vmul.f32 %v1057, %v1206
      %v1211 = vmul.f32 %v1105, %v1207
      %v1212 = vmul.f32 %v1153, %v1208
      %v1213 = vmul.f32 %v1201, %v1209
      %1215 = vrot.lane.b32.xlu0 %v1211, 8
      %v1216 = vpop.permute.xlu0 %1215
      %1219 = vrot.lane.b32.xlu0 %v1212, 16
      %v1220 = vpop.permute.xlu0 %1219
      %1223 = vrot.lane.b32.xlu0 %v1213, 24
      %v1224 = vpop.permute.xlu0 %1223
      %v1226 = vsel %vm771, %v1210, %v1216
      %vm1227 = vcmask 130048
      %v1228 = vsel %vm1227, %v1226, %v1220
      %vm1229 = vcmask 195584
      %v1230 = vsel %vm1229, %v1228, %v1224
      %v1231 = vpack.c.bf16 %v1230, %v1230
      %v1232 = vld [vmem:[%s610] sm:$0xf]
      %v1233 = vld [vmem:[%s610 + $0x4] sm:$0xf]
      %v1234 = vld [vmem:[%s610 + $0x8] sm:$0xf]
      %v1235 = vld [vmem:[%s610 + $0xc] sm:$0xf]
      %v1240 = vunpack.c.l.b16 %v1232
      %v1241 = vunpack.c.l.b16 %v1233
      %v1242 = vunpack.c.l.b16 %v1234
      %v1243 = vunpack.c.l.b16 %v1235
      %v1244 = vpack.c.b16 %v1241, %v1240
      %v1245 = vpack.c.b16 %v1243, %v1242
      %v1249 = vsel %vm652, %v1231, 0
      %1251 = vmatprep.subr.bf16.mxu0 0
      %1252 = vmatpush1.bf16.msra.mxu0 0
      %1253 = vmatprep.subr.bf16.mxu0 0
      %1254 = vmatpush1.bf16.msra.mxu0 0
      %1255 = vmatprep.subr.bf16.mxu0 0
      %1256 = vmatpush1.bf16.msra.mxu0 0
      %1257 = vmatprep.subr.bf16.mxu0 0
      %1258 = vmatpush1.bf16.msra.mxu0 0
      %1259 = vmatprep.subr.bf16.mxu0 0
      %1260 = vmatpush1.bf16.msra.mxu0 0
      %1261 = vmatprep.subr.bf16.mxu0 0
      %1262 = vmatpush1.bf16.msra.mxu0 0
      %1263 = vmatprep.subr.bf16.mxu0 0
      %1264 = vmatpush1.bf16.msra.mxu0 %v1245
      %1265 = vmatprep.subr.bf16.mxu0 0
      %1266 = vmatpush1.bf16.msra.mxu0 %v1244
      %1267 = vmatprep.subr.bf16.mxu0 0
      %1268 = vmatpush2.bf16.msra.mxu0 0
      %1269 = vmatprep.subr.bf16.mxu0 0
      %1270 = vmatpush2.bf16.msra.mxu0 0
      %1271 = vmatprep.subr.bf16.mxu0 0
      %1272 = vmatpush2.bf16.msra.mxu0 0
      %1273 = vmatprep.subr.bf16.mxu0 0
      %1274 = vmatpush2.bf16.msra.mxu0 0
      %1275 = vmatprep.subr.bf16.mxu0 0
      %1276 = vmatpush2.bf16.msra.mxu0 0
      %1277 = vmatprep.subr.bf16.mxu0 0
      %1278 = vmatpush2.bf16.msra.mxu0 0
      %1279 = vmatprep.subr.bf16.mxu0 0
      %1280 = vmatpush2.bf16.msra.mxu0 0
      %1281 = vmatprep.subr.bf16.mxu0 0
      %1282 = vmatpush2.bf16.msra.mxu0 0
      %1283 = vmatprep.mubr.bf16.mxu0 0
      %1284 = vmatmul.mubr.bf16.gmra.mxu0 %v1249
      %v1285 = vpop.f32.mrf.mxu0
      %v1286 = vadd.f32 0.0, %v1285
      %v1287 = vpop.f32.mrf.mxu0
      %v1288 = vpop.f32.mrf.mxu0
      %v1289 = vpop.f32.mrf.mxu0
      %1290 = vdwg.mxu0
      %v1291 = vadd.f32 %v649, %v1286
      %v1292 = vld [vmem:[%s613] sm:$0x1]
      %v1294 = vlaneseq
      %v1295 = vshrl.u32 %v1294, 7
      %v1296 = vsub.s32 0, %v1295
      %v1297 = vrot.slane %v1292, %v1296
      %v1299 = vadd.f32 %v1291, %v1297
      %v1300 = vld [vmem:[%s616] sm:$0x1]
      %v1301 = vld [vmem:[%s619] sm:$0x1]
      %v1302 = vsel %vm652, %v1299, 0.0
      %1303 = vadd.xlane.f32.xlu0 %v1302
      %v1304 = vpop.xlane.xlu0 %1303
      %v1305 = vmul.f32 %v1304, %v656
      %v1306 = vsub.f32 %v1299, %v1305
      %v1307 = vmul.f32 %v1306, %v1306
      %v1308 = vsel %vm652, %v1307, 0.0
      %1309 = vadd.xlane.f32.xlu0 %v1308
      %v1310 = vpop.xlane.xlu0 %1309
      %v1311 = vmul.f32 %v1310, %v656
      %v1312 = vadd.f32 %v1311, 1e-05
      %v1313 = vrsqrt.pop %v1312
      %v1314 = vmul.f32 %v1306, %v1313
      %v1316 = vlaneseq
      %v1317 = vshrl.u32 %v1316, 7
      %v1318 = vsub.s32 0, %v1317
      %v1319 = vrot.slane %v1300, %v1318
      %v1321 = vmul.f32 %v1314, %v1319
      %v1323 = vlaneseq
      %v1324 = vshrl.u32 %v1323, 7
      %v1325 = vsub.s32 0, %v1324
      %v1326 = vrot.slane %v1301, %v1325
      %v1328 = vadd.f32 %v1321, %v1326
      %v1329 = vpack.c.bf16 %v1328, %v1328
      %v1330 = vld [vmem:[%s624] sm:$0xf]
      %v1331 = vld [vmem:[%s624 + $0x4] sm:$0xf]
      %v1332 = vld [vmem:[%s624 + $0x8] sm:$0xf]
      %v1333 = vld [vmem:[%s624 + $0xc] sm:$0xf]
      %v1334 = vld [vmem:[%s627] sm:$0x1]
      %v1336 = vlaneseq
      %v1337 = vshrl.u32 %v1336, 7
      %v1338 = vsub.s32 0, %v1337
      %v1339 = vrot.slane %v1334, %v1338
      %v1345 = vunpack.c.l.b16 %v1330
      %v1346 = vunpack.c.l.b16 %v1331
      %v1347 = vunpack.c.l.b16 %v1332
      %v1348 = vunpack.c.l.b16 %v1333
      %v1349 = vpack.c.b16 %v1346, %v1345
      %v1350 = vpack.c.b16 %v1348, %v1347
      %v1354 = vsel %vm652, %v1329, 0
      %1356 = vmatprep.subr.bf16.mxu0 0
      %1357 = vmatpush1.bf16.msra.mxu0 0
      %1358 = vmatprep.subr.bf16.mxu0 0
      %1359 = vmatpush1.bf16.msra.mxu0 0
      %1360 = vmatprep.subr.bf16.mxu0 0
      %1361 = vmatpush1.bf16.msra.mxu0 0
      %1362 = vmatprep.subr.bf16.mxu0 0
      %1363 = vmatpush1.bf16.msra.mxu0 0
      %1364 = vmatprep.subr.bf16.mxu0 0
      %1365 = vmatpush1.bf16.msra.mxu0 0
      %1366 = vmatprep.subr.bf16.mxu0 0
      %1367 = vmatpush1.bf16.msra.mxu0 0
      %1368 = vmatprep.subr.bf16.mxu0 0
      %1369 = vmatpush1.bf16.msra.mxu0 %v1350
      %1370 = vmatprep.subr.bf16.mxu0 0
      %1371 = vmatpush1.bf16.msra.mxu0 %v1349
      %1372 = vmatprep.subr.bf16.mxu0 0
      %1373 = vmatpush2.bf16.msra.mxu0 0
      %1374 = vmatprep.subr.bf16.mxu0 0
      %1375 = vmatpush2.bf16.msra.mxu0 0
      %1376 = vmatprep.subr.bf16.mxu0 0
      %1377 = vmatpush2.bf16.msra.mxu0 0
      %1378 = vmatprep.subr.bf16.mxu0 0
      %1379 = vmatpush2.bf16.msra.mxu0 0
      %1380 = vmatprep.subr.bf16.mxu0 0
      %1381 = vmatpush2.bf16.msra.mxu0 0
      %1382 = vmatprep.subr.bf16.mxu0 0
      %1383 = vmatpush2.bf16.msra.mxu0 0
      %1384 = vmatprep.subr.bf16.mxu0 0
      %1385 = vmatpush2.bf16.msra.mxu0 0
      %1386 = vmatprep.subr.bf16.mxu0 0
      %1387 = vmatpush2.bf16.msra.mxu0 0
      %1388 = vmatprep.mubr.bf16.mxu0 0
      %1389 = vmatmul.mubr.bf16.gmra.mxu0 %v1354
      %v1390 = vpop.f32.mrf.mxu0
      %v1391 = vadd.f32 %v1339, %v1390
      %v1392 = vpop.f32.mrf.mxu0
      %v1393 = vpop.f32.mrf.mxu0
      %v1394 = vpop.f32.mrf.mxu0
      %1395 = vdwg.mxu0
      %v1396 = vmul.f32 %v1391, %v1391
      %v1397 = vmul.f32 %v1391, %v1396
      %v1398 = vmul.f32 %v1397, 0.044715
      %v1399 = vadd.f32 %v1391, %v1398
      %v1400 = vmul.f32 %v1399, 0.7978846
      %v1401 = vtanh.pop %v1400
      %v1402 = vadd.f32 %v1401, 1.0
      %v1403 = vmul.f32 %v1402, 0.5
      %v1404 = vmul.f32 %v1391, %v1403
      %v1405 = vpack.c.bf16 %v1404, %v1404
      %v1406 = vld [vmem:[%s632] sm:$0xf]
      %v1407 = vld [vmem:[%s632 + $0x4] sm:$0xf]
      %v1408 = vld [vmem:[%s632 + $0x8] sm:$0xf]
      %v1409 = vld [vmem:[%s632 + $0xc] sm:$0xf]
      %v1410 = vld [vmem:[%s632 + $0x10] sm:$0xf]
      %v1411 = vld [vmem:[%s632 + $0x14] sm:$0xf]
      %v1412 = vld [vmem:[%s632 + $0x18] sm:$0xf]
      %v1413 = vld [vmem:[%s632 + $0x1c] sm:$0xf]
      %v1422 = vunpack.c.l.b16 %v1406
      %v1423 = vunpack.c.l.b16 %v1407
      %v1424 = vunpack.c.l.b16 %v1408
      %v1425 = vunpack.c.l.b16 %v1409
      %v1426 = vunpack.c.l.b16 %v1410
      %v1427 = vunpack.c.l.b16 %v1411
      %v1428 = vunpack.c.l.b16 %v1412
      %v1429 = vunpack.c.l.b16 %v1413
      %v1430 = vpack.c.b16 %v1423, %v1422
      %v1431 = vpack.c.b16 %v1425, %v1424
      %v1432 = vpack.c.b16 %v1427, %v1426
      %v1433 = vpack.c.b16 %v1429, %v1428
      %vm1438 = vcmask 523264
      %v1440 = vsel %vm1438, %v1405, 0
      %1442 = vmatprep.subr.bf16.mxu0 0
      %1443 = vmatpush1.bf16.msra.mxu0 0
      %1444 = vmatprep.subr.bf16.mxu0 0
      %1445 = vmatpush1.bf16.msra.mxu0 0
      %1446 = vmatprep.subr.bf16.mxu0 0
      %1447 = vmatpush1.bf16.msra.mxu0 0
      %1448 = vmatprep.subr.bf16.mxu0 0
      %1449 = vmatpush1.bf16.msra.mxu0 0
      %1450 = vmatprep.subr.bf16.mxu0 0
      %1451 = vmatpush1.bf16.msra.mxu0 %v1433
      %1452 = vmatprep.subr.bf16.mxu0 0
      %1453 = vmatpush1.bf16.msra.mxu0 %v1432
      %1454 = vmatprep.subr.bf16.mxu0 0
      %1455 = vmatpush1.bf16.msra.mxu0 %v1431
      %1456 = vmatprep.subr.bf16.mxu0 0
      %1457 = vmatpush1.bf16.msra.mxu0 %v1430
      %1458 = vmatprep.subr.bf16.mxu0 0
      %1459 = vmatpush2.bf16.msra.mxu0 0
      %1460 = vmatprep.subr.bf16.mxu0 0
      %1461 = vmatpush2.bf16.msra.mxu0 0
      %1462 = vmatprep.subr.bf16.mxu0 0
      %1463 = vmatpush2.bf16.msra.mxu0 0
      %1464 = vmatprep.subr.bf16.mxu0 0
      %1465 = vmatpush2.bf16.msra.mxu0 0
      %1466 = vmatprep.subr.bf16.mxu0 0
      %1467 = vmatpush2.bf16.msra.mxu0 0
      %1468 = vmatprep.subr.bf16.mxu0 0
      %1469 = vmatpush2.bf16.msra.mxu0 0
      %1470 = vmatprep.subr.bf16.mxu0 0
      %1471 = vmatpush2.bf16.msra.mxu0 0
      %1472 = vmatprep.subr.bf16.mxu0 0
      %1473 = vmatpush2.bf16.msra.mxu0 0
      %1474 = vmatprep.mubr.bf16.mxu0 0
      %1475 = vmatmul.mubr.bf16.gmra.mxu0 %v1440
      %v1476 = vpop.f32.mrf.mxu0
      %v1477 = vadd.f32 0.0, %v1476
      %v1478 = vpop.f32.mrf.mxu0
      %v1479 = vpop.f32.mrf.mxu0
      %v1480 = vpop.f32.mrf.mxu0
      %1481 = vdwg.mxu0
      %v1482 = vadd.f32 %v1299, %v1477
      %v1483 = vld [vmem:[%s635] sm:$0x1]
      %v1485 = vlaneseq
      %v1486 = vshrl.u32 %v1485, 7
      %v1487 = vsub.s32 0, %v1486
      %v1488 = vrot.slane %v1483, %v1487
      %v1490 = vadd.f32 %v1482, %v1488
      %1491 = vst.msk [vmem:[#allocation2] sm:$0xff] %vm652, %v1490
      %p1492 = scmp.eq.s32.totalorder %s29, 1
      // Predicated region
      $region77: #{_lambda_.2} parent=71 // pred_check
        %p1493 = pneg %p1492
      $region78: #{_lambda_.2} parent=71 // pred_check_branch
        %1495 = sbr.rel (%p1493) target = $region80
      $region79: #{_lambda_.2} parent=71 // pred_region
        %v1496 = vpack.c.bf16 %v1490, %v1490
        %vm1497 = vcmask 257024
        %1498 = vst.msk [vmem:[%s639] sm:$0xf] %vm1497, %v1496
      $region80: #{_lambda_.2} parent=71 // pred_fallthru
        _
      %p1499 = scmp.lt.s32.totalorder %s28, 3
      %s1500 = scalar_select %p1499, %s28, 3
      %s1501 = smul.addr %s1500, 4
      %s1502 = scalar_lea.vmem %s13, %s1501
      // Predicated region
      $region81: #{_lambda_.2} parent=71 // pred_check
        %p1503 = pneg %p392
      $region82: #{_lambda_.2} parent=71 // pred_check_branch
        %1505 = sbr.rel (%p1503) target = $region84
      $region83: #{_lambda_.2} parent=71 // pred_region
        _
      $region84: #{_lambda_.2} parent=71 // pred_fallthru
        _
    $region72: #{_lambda_.2} parent=5 // pred_fallthru
      _
    %p1506 = scmp.le.s32.totalorder 2, %s19
    // Predicated region
    $region85: #{_lambda_.2} parent=5 // pred_check
      %p1507 = pneg %p1506
    $region86: #{_lambda_.2} parent=5 // pred_check_branch
      %1509 = sbr.rel (%p1507) target = $region88
    $region87: #{_lambda_.2} parent=5 // pred_region
      %s1510 = ssub.s32 %s19, 2
      // Predicated region
      $region89: #{_lambda_.2} parent=87 // pred_check
        %p1511 = pneg %p398
      $region90: #{_lambda_.2} parent=87 // pred_check_branch
        %1513 = sbr.rel (%p1511) target = $region92
      $region91: #{_lambda_.2} parent=87 // pred_region
        %p1514 = scmp.lt.s32.totalorder %s30, 3
        %s1515 = scalar_select %p1514, %s30, 3
        %s1516 = smul.addr %s1515, 4
        %s1517 = scalar_lea.vmem %s13, %s1516
      $region92: #{_lambda_.2} parent=87 // pred_fallthru
        _
    $region88: #{_lambda_.2} parent=5 // pred_fallthru
      _
  $region6: #{_lambda_.2} parent=0 // loop_footer
    %s23 = sadd.s32 1, %s19
  $region7: #{_lambda_.2} parent=0 // loop_footer_branch
    %18 = sbr.rel target = $region3
  $region8: #{_lambda_.2} parent=0 // loop_exit
    _

</llo_original>
